<compile_context>
chip_gen: v7x
topology: tpu7x:2x2x1
jax: 0.10.0
libtpu: 0.0.40
codegen_flags: <defaults>
</compile_context>

<pallas_src>
import jax
import jax.numpy as jnp
from jax import lax
from jax.experimental import pallas as pl
from jax.experimental.pallas import tpu as pltpu


def _lstm2_fused_kernel(x_ref, wih1_ref, b1_ref, wbig_ref, b2_ref, out_ref):
    """Fused 2-layer LSTM over the whole sequence (one batch block).

    x_ref   : (S, B, In)       time-major input block
    wih1_ref: (In, 4H)         layer-1 W_ih^T
    b1_ref  : (1, 4H)          layer-1 b_ih + b_hh
    wbig_ref: (2H, 8H)         [[whh1^T, wih2^T], [0, whh2^T]]
    b2_ref  : (1, 4H)          layer-2 b_ih + b_hh
    out_ref : (B, (S+4)*H)     [y_0 .. y_{S-1} | h1_n | h2_n | c1_n | c2_n]
    """
    S, B, In = x_ref.shape
    H4 = b1_ref.shape[-1]
    H = H4 // 4

    x = x_ref[...]                        # (S, B, In)
    wih1 = wih1_ref[...]                  # (In, 4H)
    wbig = wbig_ref[...]                  # (2H, 8H)
    b1 = b1_ref[...]                      # (1, 4H)
    b2 = b2_ref[...]                      # (1, 4H)

    # ---- Hoisted, non-recurrent layer-1 input projection (time-major). ----
    # One MXU pass; per-step slices below are contiguous sublane slices.
    gx1 = jnp.dot(x.reshape(S * B, In), wih1,
                  preferred_element_type=jnp.float32) + b1       # (S*B, 4H)

    h1 = jnp.zeros((B, H), jnp.float32)
    c1 = jnp.zeros((B, H), jnp.float32)
    h2 = jnp.zeros((B, H), jnp.float32)
    c2 = jnp.zeros((B, H), jnp.float32)
    rec1 = jnp.zeros((B, 4 * H), jnp.float32)   # h1_{-1} @ whh1^T == 0

    def cell(gates, c):
        # Full 128-lane transcendentals (EUP slot), slice afterwards.
        sg = jax.nn.sigmoid(gates)        # (B, 4H)
        th = jnp.tanh(gates)              # (B, 4H)
        i_g = sg[:, 0 * H:1 * H]
        f_g = sg[:, 1 * H:2 * H]
        g_g = th[:, 2 * H:3 * H]
        o_g = sg[:, 3 * H:4 * H]
        c_new = f_g * c + i_g * g_g
        h_new = o_g * jnp.tanh(c_new)
        return h_new, c_new

    ys = []
    # S is small and static -> unrolled in-kernel time loop (no grid steps).
    for t in range(S):
        # Layer 1: gates = hoisted input projection + recurrent part computed
        # by the previous step's fused matmul (zero at t=0).
        gates1 = gx1[t * B:(t + 1) * B, :] + rec1
        h1, c1 = cell(gates1, c1)

        # ONE fused matmul per step: [h1_t | h2_{t-1}] @ W_big  -> (B, 8H).
        big = jnp.dot(jnp.concatenate([h1, h2], axis=1), wbig,
                      preferred_element_type=jnp.float32)
        rec1 = big[:, :4 * H]             # feeds layer-1 gates at step t+1

        # Dropout(p=0.5) between layers: identity in eval mode.
        gates2 = big[:, 4 * H:] + b2
        h2, c2 = cell(gates2, c2)
        ys.append(h2)

    # Single lane-dense store: outputs + final states in one 384-lane slab.
    slab = jnp.concatenate(ys + [h1, h2, c1, c2], axis=-1)   # (B, (S+4)*H)
    out_ref[...] = slab.astype(out_ref.dtype)


def prepare_params(params):
    """One-time parameter preparation (hoisted out of the per-call path)."""
    H = params["w_hh_l0"].shape[1]
    wih1_t = jnp.asarray(params["w_ih_l0"].T, jnp.float32)           # (In, 4H)
    whh1_t = jnp.asarray(params["w_hh_l0"].T, jnp.float32)           # (H, 4H)
    wih2_t = jnp.asarray(params["w_ih_l1"].T, jnp.float32)           # (H, 4H)
    whh2_t = jnp.asarray(params["w_hh_l1"].T, jnp.float32)           # (H, 4H)
    b1 = jnp.asarray((params["b_ih_l0"] + params["b_hh_l0"])[None, :],
                     jnp.float32)                                    # (1, 4H)
    b2 = jnp.asarray((params["b_ih_l1"] + params["b_hh_l1"])[None, :],
                     jnp.float32)                                    # (1, 4H)
    w_big = jnp.concatenate(
        [jnp.concatenate([whh1_t, wih2_t], axis=1),                  # (H, 8H)
         jnp.concatenate([jnp.zeros((H, 4 * H), jnp.float32), whh2_t],
                         axis=1)],                                   # (H, 8H)
        axis=0)                                                      # (2H, 8H)
    return {"wih1": wih1_t, "b1": b1, "w_big": w_big, "b2": b2, "H": H}


def lstm2_pallas(x_tm, prep, block_b=None):
    """Run the fused 2-layer LSTM kernel.

    x_tm: (S, B, In) float32, time-major.
    Returns (y (B, S, H), h_n (2, B, H), c_n (2, B, H)).
    """
    S, B, In = x_tm.shape
    H = prep["H"]
    if block_b is None:
        block_b = B           # one batch block at small B; shard when B grows
    assert B % block_b == 0

    grid_spec = pltpu.PrefetchScalarGridSpec(
        num_scalar_prefetch=0,
        grid=(B // block_b,),
        in_specs=[
            pl.BlockSpec((S, block_b, In), lambda i: (0, i, 0)),
            pl.BlockSpec((In, 4 * H), lambda i: (0, 0)),
            pl.BlockSpec((1, 4 * H), lambda i: (0, 0)),
            pl.BlockSpec((2 * H, 8 * H), lambda i: (0, 0)),
            pl.BlockSpec((1, 4 * H), lambda i: (0, 0)),
        ],
        out_specs=pl.BlockSpec((block_b, (S + 4) * H), lambda i: (i, 0)),
    )

    slab = pl.pallas_call(
        _lstm2_fused_kernel,
        out_shape=jax.ShapeDtypeStruct((B, (S + 4) * H), jnp.float32),
        grid_spec=grid_spec,
        compiler_params=pltpu.CompilerParams(
            dimension_semantics=("parallel",)),
    )(x_tm, prep["wih1"], prep["b1"], prep["w_big"], prep["b2"])

    # Unpack the slab (wrapper-side, cheap): y is row-major contiguous.
    y = slab[:, :S * H].reshape(B, S, H)
    h1 = slab[:, (S + 0) * H:(S + 1) * H]
    h2 = slab[:, (S + 1) * H:(S + 2) * H]
    c1 = slab[:, (S + 2) * H:(S + 3) * H]
    c2 = slab[:, (S + 3) * H:(S + 4) * H]
    h_n = jnp.stack([h1, h2])
    c_n = jnp.stack([c1, c2])
    return y, h_n, c_n


def lstm_module_forward(x, prep):
    """Forward pass of LSTMLayer.

    x: (batch, input_size, seq)  -- matches the PyTorch module input (NCL).
    Returns (output (batch, seq, H), (h_n (2, batch, H), c_n (2, batch, H))),
    mirroring `x = torch.transpose(x,1,2); x = self.lstm(x); return x`.
    """
    # Single transpose straight to time-major (S, B, In) for the kernel.
    x_tm = jnp.transpose(x, (2, 0, 1))
    y, h_n, c_n = lstm2_pallas(x_tm, prep)
    return y, (h_n, c_n)


def _lstm_layer_ref(x_tbf, w_ih, w_hh, b_ih, b_hh):
    """Pure-JAX reference for one LSTM layer (lax.scan, time-major)."""
    seq, batch, _ = x_tbf.shape
    H = w_hh.shape[1]
    h0 = jnp.zeros((batch, H), jnp.float32)
    c0 = jnp.zeros((batch, H), jnp.float32)

    def step(carry, x_t):
        h, c = carry
        gates = x_t @ w_ih.T + b_ih + h @ w_hh.T + b_hh
        i = jax.nn.sigmoid(gates[:, 0 * H:1 * H])
        f = jax.nn.sigmoid(gates[:, 1 * H:2 * H])
        g = jnp.tanh(gates[:, 2 * H:3 * H])
        o = jax.nn.sigmoid(gates[:, 3 * H:4 * H])
        c_new = f * c + i * g
        h_new = o * jnp.tanh(c_new)
        return (h_new, c_new), h_new

    (h_n, c_n), ys = lax.scan(step, (h0, c0), x_tbf)
    return ys, h_n, c_n


def _init_params(key, input_size, hidden_size):
    """Deterministic init matching PyTorch LSTM param shapes (2 layers)."""
    H = hidden_size
    bound = 1.0 / jnp.sqrt(jnp.float32(H))
    keys = jax.random.split(key, 8)

    def u(k, shape):
        return jax.random.uniform(k, shape, jnp.float32, -bound, bound)

    return {
        "w_ih_l0": u(keys[0], (4 * H, input_size)),
        "w_hh_l0": u(keys[1], (4 * H, H)),
        "b_ih_l0": u(keys[2], (4 * H,)),
        "b_hh_l0": u(keys[3], (4 * H,)),
        "w_ih_l1": u(keys[4], (4 * H, H)),
        "w_hh_l1": u(keys[5], (4 * H, H)),
        "b_ih_l1": u(keys[6], (4 * H,)),
        "b_hh_l1": u(keys[7], (4 * H,)),
    }


if __name__ == "__main__":
    # LSTMLayer(input_size=4, hidden_size=32, window_size=8)
    batch, input_size, hidden_size, seq = 2, 4, 32, 8

    key = jax.random.PRNGKey(0)
    k_x, k_p = jax.random.split(key)
    x = jax.random.normal(k_x, (batch, input_size, seq), jnp.float32)
    params = _init_params(k_p, input_size, hidden_size)

    # One-time parameter prep (transposes, bias sums, W_big) outside hot path.
    prep = prepare_params(params)

    out, (h_n, c_n) = lstm_module_forward(x, prep)
    out = jax.block_until_ready(out)
    h_n = jax.block_until_ready(h_n)
    c_n = jax.block_until_ready(c_n)

    # Cross-check against pure-JAX reference (f32 end-to-end).
    x_tbf = jnp.transpose(x, (2, 0, 1))
    y1r, h1r, c1r = _lstm_layer_ref(x_tbf, params["w_ih_l0"], params["w_hh_l0"],
                                    params["b_ih_l0"], params["b_hh_l0"])
    y2r, h2r, c2r = _lstm_layer_ref(y1r, params["w_ih_l1"], params["w_hh_l1"],
                                    params["b_ih_l1"], params["b_hh_l1"])
    out_ref = jnp.transpose(y2r, (1, 0, 2))
    assert out.shape == (batch, seq, hidden_size)
    assert h_n.shape == (2, batch, hidden_size)
    assert c_n.shape == (2, batch, hidden_size)
    assert jnp.allclose(out, out_ref, rtol=1e-5, atol=1e-5)
    assert jnp.allclose(h_n, jnp.stack([h1r, h2r]), rtol=1e-5, atol=1e-5)
    assert jnp.allclose(c_n, jnp.stack([c1r, c2r]), rtol=1e-5, atol=1e-5)

    print("KERNEL_OK")
</pallas_src>

<mosaic_0001>
module attributes {stable_mosaic.version = 11 : i64} {
  func.func @_lstm2_fused_kernel(%arg0: i32, %arg1: memref<8x2x4xf32, #tpu.memory_space<vmem>>, %arg2: memref<4x128xf32, #tpu.memory_space<vmem>>, %arg3: memref<1x128xf32, #tpu.memory_space<vmem>>, %arg4: memref<64x256xf32, #tpu.memory_space<vmem>>, %arg5: memref<1x128xf32, #tpu.memory_space<vmem>>, %arg6: memref<2x384xf32, #tpu.memory_space<vmem>>) attributes {dimension_semantics = [#tpu.dimension_semantics<parallel>], iteration_bounds = array<i64: 1>, scalar_prefetch = 0 : i64, scratch_operands = 0 : i64, tpu.core_type = #tpu.core_type<tc>, window_params = [{transform_indices = @transform_0, window_bounds = array<i64: 8, 2, 4>}, {pipeline_mode = #tpu.pipeline_mode<synchronous>, transform_indices = @transform_1, window_bounds = array<i64: 4, 128>}, {pipeline_mode = #tpu.pipeline_mode<synchronous>, transform_indices = @transform_2, window_bounds = array<i64: 1, 128>}, {pipeline_mode = #tpu.pipeline_mode<synchronous>, transform_indices = @transform_3, window_bounds = array<i64: 64, 256>}, {pipeline_mode = #tpu.pipeline_mode<synchronous>, transform_indices = @transform_4, window_bounds = array<i64: 1, 128>}, {transform_indices = @transform_5, window_bounds = array<i64: 2, 384>}]} {
    %c0 = arith.constant 0 : index
    %c0_0 = arith.constant 0 : index
    %c0_1 = arith.constant 0 : index
    %0 = vector.load %arg1[%c0, %c0_0, %c0_1] : memref<8x2x4xf32, #tpu.memory_space<vmem>>, vector<8x2x4xf32>
    %c0_2 = arith.constant 0 : index
    %c0_3 = arith.constant 0 : index
    %1 = vector.load %arg2[%c0_2, %c0_3] : memref<4x128xf32, #tpu.memory_space<vmem>>, vector<4x128xf32>
    %c0_4 = arith.constant 0 : index
    %c0_5 = arith.constant 0 : index
    %2 = vector.load %arg4[%c0_4, %c0_5] : memref<64x256xf32, #tpu.memory_space<vmem>>, vector<64x256xf32>
    %c0_6 = arith.constant 0 : index
    %c0_7 = arith.constant 0 : index
    %3 = vector.load %arg3[%c0_6, %c0_7] : memref<1x128xf32, #tpu.memory_space<vmem>>, vector<1x128xf32>
    %c0_8 = arith.constant 0 : index
    %c0_9 = arith.constant 0 : index
    %4 = vector.load %arg5[%c0_8, %c0_9] : memref<1x128xf32, #tpu.memory_space<vmem>>, vector<1x128xf32>
    %5 = vector.shape_cast %0 : vector<8x2x4xf32> to vector<16x4xf32>
    %cst = arith.constant dense<0.000000e+00> : vector<16x128xf32>
    %6 = tpu.matmul %5, %1, %cst {dimension_numbers = #tpu.dot_dimension_numbers<[1], [0], [0], [1], [0, 0, 1, 1], [], []>} : vector<16x4xf32>, vector<4x128xf32>, vector<16x128xf32> -> vector<16x128xf32>
    %7 = vector.broadcast %3 : vector<1x128xf32> to vector<16x128xf32>
    %8 = arith.addf %6, %7 : vector<16x128xf32>
    %cst_10 = arith.constant 0.000000e+00 : f32
    %9 = vector.broadcast %cst_10 : f32 to vector<2x32xf32>
    %cst_11 = arith.constant 0.000000e+00 : f32
    %10 = vector.broadcast %cst_11 : f32 to vector<2x32xf32>
    %cst_12 = arith.constant 0.000000e+00 : f32
    %11 = vector.broadcast %cst_12 : f32 to vector<2x32xf32>
    %cst_13 = arith.constant 0.000000e+00 : f32
    %12 = vector.broadcast %cst_13 : f32 to vector<2x128xf32>
    %13 = vector.extract_strided_slice %8 {offsets = [0, 0], sizes = [2, 128], strides = [1, 1]} : vector<16x128xf32> to vector<2x128xf32>
    %14 = arith.addf %13, %12 : vector<2x128xf32>
    %15 = arith.negf %14 : vector<2x128xf32>
    %16 = math.exp %15 : vector<2x128xf32>
    %cst_14 = arith.constant 1.000000e+00 : f32
    %17 = vector.broadcast %cst_14 : f32 to vector<2x128xf32>
    %18 = arith.addf %17, %16 : vector<2x128xf32>
    %19 = arith.divf %17, %18 : vector<2x128xf32>
    %20 = math.tanh %14 : vector<2x128xf32>
    %21 = vector.extract_strided_slice %19 {offsets = [0, 0], sizes = [2, 32], strides = [1, 1]} : vector<2x128xf32> to vector<2x32xf32>
    %22 = vector.extract_strided_slice %19 {offsets = [0, 32], sizes = [2, 32], strides = [1, 1]} : vector<2x128xf32> to vector<2x32xf32>
    %23 = vector.extract_strided_slice %20 {offsets = [0, 64], sizes = [2, 32], strides = [1, 1]} : vector<2x128xf32> to vector<2x32xf32>
    %24 = vector.extract_strided_slice %19 {offsets = [0, 96], sizes = [2, 32], strides = [1, 1]} : vector<2x128xf32> to vector<2x32xf32>
    %25 = arith.mulf %22, %9 : vector<2x32xf32>
    %26 = arith.mulf %21, %23 : vector<2x32xf32>
    %27 = arith.addf %25, %26 : vector<2x32xf32>
    %28 = math.tanh %27 : vector<2x32xf32>
    %29 = arith.mulf %24, %28 : vector<2x32xf32>
    %30 = tpu.concatenate %29, %10 in 1 : vector<2x32xf32>, vector<2x32xf32> -> vector<2x64xf32>
    %cst_15 = arith.constant dense<0.000000e+00> : vector<2x256xf32>
    %31 = tpu.matmul %30, %2, %cst_15 {dimension_numbers = #tpu.dot_dimension_numbers<[1], [0], [0], [1], [0, 0, 1, 1], [], []>} : vector<2x64xf32>, vector<64x256xf32>, vector<2x256xf32> -> vector<2x256xf32>
    %32 = vector.extract_strided_slice %31 {offsets = [0, 0], sizes = [2, 128], strides = [1, 1]} : vector<2x256xf32> to vector<2x128xf32>
    %33 = vector.extract_strided_slice %31 {offsets = [0, 128], sizes = [2, 128], strides = [1, 1]} : vector<2x256xf32> to vector<2x128xf32>
    %34 = vector.broadcast %4 : vector<1x128xf32> to vector<2x128xf32>
    %35 = arith.addf %33, %34 : vector<2x128xf32>
    %36 = arith.negf %35 : vector<2x128xf32>
    %37 = math.exp %36 : vector<2x128xf32>
    %cst_16 = arith.constant 1.000000e+00 : f32
    %38 = vector.broadcast %cst_16 : f32 to vector<2x128xf32>
    %39 = arith.addf %38, %37 : vector<2x128xf32>
    %40 = arith.divf %38, %39 : vector<2x128xf32>
    %41 = math.tanh %35 : vector<2x128xf32>
    %42 = vector.extract_strided_slice %40 {offsets = [0, 0], sizes = [2, 32], strides = [1, 1]} : vector<2x128xf32> to vector<2x32xf32>
    %43 = vector.extract_strided_slice %40 {offsets = [0, 32], sizes = [2, 32], strides = [1, 1]} : vector<2x128xf32> to vector<2x32xf32>
    %44 = vector.extract_strided_slice %41 {offsets = [0, 64], sizes = [2, 32], strides = [1, 1]} : vector<2x128xf32> to vector<2x32xf32>
    %45 = vector.extract_strided_slice %40 {offsets = [0, 96], sizes = [2, 32], strides = [1, 1]} : vector<2x128xf32> to vector<2x32xf32>
    %46 = arith.mulf %43, %11 : vector<2x32xf32>
    %47 = arith.mulf %42, %44 : vector<2x32xf32>
    %48 = arith.addf %46, %47 : vector<2x32xf32>
    %49 = math.tanh %48 : vector<2x32xf32>
    %50 = arith.mulf %45, %49 : vector<2x32xf32>
    %51 = vector.extract_strided_slice %8 {offsets = [2, 0], sizes = [2, 128], strides = [1, 1]} : vector<16x128xf32> to vector<2x128xf32>
    %52 = arith.addf %51, %32 : vector<2x128xf32>
    %53 = arith.negf %52 : vector<2x128xf32>
    %54 = math.exp %53 : vector<2x128xf32>
    %cst_17 = arith.constant 1.000000e+00 : f32
    %55 = vector.broadcast %cst_17 : f32 to vector<2x128xf32>
    %56 = arith.addf %55, %54 : vector<2x128xf32>
    %57 = arith.divf %55, %56 : vector<2x128xf32>
    %58 = math.tanh %52 : vector<2x128xf32>
    %59 = vector.extract_strided_slice %57 {offsets = [0, 0], sizes = [2, 32], strides = [1, 1]} : vector<2x128xf32> to vector<2x32xf32>
    %60 = vector.extract_strided_slice %57 {offsets = [0, 32], sizes = [2, 32], strides = [1, 1]} : vector<2x128xf32> to vector<2x32xf32>
    %61 = vector.extract_strided_slice %58 {offsets = [0, 64], sizes = [2, 32], strides = [1, 1]} : vector<2x128xf32> to vector<2x32xf32>
    %62 = vector.extract_strided_slice %57 {offsets = [0, 96], sizes = [2, 32], strides = [1, 1]} : vector<2x128xf32> to vector<2x32xf32>
    %63 = arith.mulf %60, %27 : vector<2x32xf32>
    %64 = arith.mulf %59, %61 : vector<2x32xf32>
    %65 = arith.addf %63, %64 : vector<2x32xf32>
    %66 = math.tanh %65 : vector<2x32xf32>
    %67 = arith.mulf %62, %66 : vector<2x32xf32>
    %68 = tpu.concatenate %67, %50 in 1 : vector<2x32xf32>, vector<2x32xf32> -> vector<2x64xf32>
    %cst_18 = arith.constant dense<0.000000e+00> : vector<2x256xf32>
    %69 = tpu.matmul %68, %2, %cst_18 {dimension_numbers = #tpu.dot_dimension_numbers<[1], [0], [0], [1], [0, 0, 1, 1], [], []>} : vector<2x64xf32>, vector<64x256xf32>, vector<2x256xf32> -> vector<2x256xf32>
    %70 = vector.extract_strided_slice %69 {offsets = [0, 0], sizes = [2, 128], strides = [1, 1]} : vector<2x256xf32> to vector<2x128xf32>
    %71 = vector.extract_strided_slice %69 {offsets = [0, 128], sizes = [2, 128], strides = [1, 1]} : vector<2x256xf32> to vector<2x128xf32>
    %72 = vector.broadcast %4 : vector<1x128xf32> to vector<2x128xf32>
    %73 = arith.addf %71, %72 : vector<2x128xf32>
    %74 = arith.negf %73 : vector<2x128xf32>
    %75 = math.exp %74 : vector<2x128xf32>
    %cst_19 = arith.constant 1.000000e+00 : f32
    %76 = vector.broadcast %cst_19 : f32 to vector<2x128xf32>
    %77 = arith.addf %76, %75 : vector<2x128xf32>
    %78 = arith.divf %76, %77 : vector<2x128xf32>
    %79 = math.tanh %73 : vector<2x128xf32>
    %80 = vector.extract_strided_slice %78 {offsets = [0, 0], sizes = [2, 32], strides = [1, 1]} : vector<2x128xf32> to vector<2x32xf32>
    %81 = vector.extract_strided_slice %78 {offsets = [0, 32], sizes = [2, 32], strides = [1, 1]} : vector<2x128xf32> to vector<2x32xf32>
    %82 = vector.extract_strided_slice %79 {offsets = [0, 64], sizes = [2, 32], strides = [1, 1]} : vector<2x128xf32> to vector<2x32xf32>
    %83 = vector.extract_strided_slice %78 {offsets = [0, 96], sizes = [2, 32], strides = [1, 1]} : vector<2x128xf32> to vector<2x32xf32>
    %84 = arith.mulf %81, %48 : vector<2x32xf32>
    %85 = arith.mulf %80, %82 : vector<2x32xf32>
    %86 = arith.addf %84, %85 : vector<2x32xf32>
    %87 = math.tanh %86 : vector<2x32xf32>
    %88 = arith.mulf %83, %87 : vector<2x32xf32>
    %89 = vector.extract_strided_slice %8 {offsets = [4, 0], sizes = [2, 128], strides = [1, 1]} : vector<16x128xf32> to vector<2x128xf32>
    %90 = arith.addf %89, %70 : vector<2x128xf32>
    %91 = arith.negf %90 : vector<2x128xf32>
    %92 = math.exp %91 : vector<2x128xf32>
    %cst_20 = arith.constant 1.000000e+00 : f32
    %93 = vector.broadcast %cst_20 : f32 to vector<2x128xf32>
    %94 = arith.addf %93, %92 : vector<2x128xf32>
    %95 = arith.divf %93, %94 : vector<2x128xf32>
    %96 = math.tanh %90 : vector<2x128xf32>
    %97 = vector.extract_strided_slice %95 {offsets = [0, 0], sizes = [2, 32], strides = [1, 1]} : vector<2x128xf32> to vector<2x32xf32>
    %98 = vector.extract_strided_slice %95 {offsets = [0, 32], sizes = [2, 32], strides = [1, 1]} : vector<2x128xf32> to vector<2x32xf32>
    %99 = vector.extract_strided_slice %96 {offsets = [0, 64], sizes = [2, 32], strides = [1, 1]} : vector<2x128xf32> to vector<2x32xf32>
    %100 = vector.extract_strided_slice %95 {offsets = [0, 96], sizes = [2, 32], strides = [1, 1]} : vector<2x128xf32> to vector<2x32xf32>
    %101 = arith.mulf %98, %65 : vector<2x32xf32>
    %102 = arith.mulf %97, %99 : vector<2x32xf32>
    %103 = arith.addf %101, %102 : vector<2x32xf32>
    %104 = math.tanh %103 : vector<2x32xf32>
    %105 = arith.mulf %100, %104 : vector<2x32xf32>
    %106 = tpu.concatenate %105, %88 in 1 : vector<2x32xf32>, vector<2x32xf32> -> vector<2x64xf32>
    %cst_21 = arith.constant dense<0.000000e+00> : vector<2x256xf32>
    %107 = tpu.matmul %106, %2, %cst_21 {dimension_numbers = #tpu.dot_dimension_numbers<[1], [0], [0], [1], [0, 0, 1, 1], [], []>} : vector<2x64xf32>, vector<64x256xf32>, vector<2x256xf32> -> vector<2x256xf32>
    %108 = vector.extract_strided_slice %107 {offsets = [0, 0], sizes = [2, 128], strides = [1, 1]} : vector<2x256xf32> to vector<2x128xf32>
    %109 = vector.extract_strided_slice %107 {offsets = [0, 128], sizes = [2, 128], strides = [1, 1]} : vector<2x256xf32> to vector<2x128xf32>
    %110 = vector.broadcast %4 : vector<1x128xf32> to vector<2x128xf32>
    %111 = arith.addf %109, %110 : vector<2x128xf32>
    %112 = arith.negf %111 : vector<2x128xf32>
    %113 = math.exp %112 : vector<2x128xf32>
    %cst_22 = arith.constant 1.000000e+00 : f32
    %114 = vector.broadcast %cst_22 : f32 to vector<2x128xf32>
    %115 = arith.addf %114, %113 : vector<2x128xf32>
    %116 = arith.divf %114, %115 : vector<2x128xf32>
    %117 = math.tanh %111 : vector<2x128xf32>
    %118 = vector.extract_strided_slice %116 {offsets = [0, 0], sizes = [2, 32], strides = [1, 1]} : vector<2x128xf32> to vector<2x32xf32>
    %119 = vector.extract_strided_slice %116 {offsets = [0, 32], sizes = [2, 32], strides = [1, 1]} : vector<2x128xf32> to vector<2x32xf32>
    %120 = vector.extract_strided_slice %117 {offsets = [0, 64], sizes = [2, 32], strides = [1, 1]} : vector<2x128xf32> to vector<2x32xf32>
    %121 = vector.extract_strided_slice %116 {offsets = [0, 96], sizes = [2, 32], strides = [1, 1]} : vector<2x128xf32> to vector<2x32xf32>
    %122 = arith.mulf %119, %86 : vector<2x32xf32>
    %123 = arith.mulf %118, %120 : vector<2x32xf32>
    %124 = arith.addf %122, %123 : vector<2x32xf32>
    %125 = math.tanh %124 : vector<2x32xf32>
    %126 = arith.mulf %121, %125 : vector<2x32xf32>
    %127 = vector.extract_strided_slice %8 {offsets = [6, 0], sizes = [2, 128], strides = [1, 1]} : vector<16x128xf32> to vector<2x128xf32>
    %128 = arith.addf %127, %108 : vector<2x128xf32>
    %129 = arith.negf %128 : vector<2x128xf32>
    %130 = math.exp %129 : vector<2x128xf32>
    %cst_23 = arith.constant 1.000000e+00 : f32
    %131 = vector.broadcast %cst_23 : f32 to vector<2x128xf32>
    %132 = arith.addf %131, %130 : vector<2x128xf32>
    %133 = arith.divf %131, %132 : vector<2x128xf32>
    %134 = math.tanh %128 : vector<2x128xf32>
    %135 = vector.extract_strided_slice %133 {offsets = [0, 0], sizes = [2, 32], strides = [1, 1]} : vector<2x128xf32> to vector<2x32xf32>
    %136 = vector.extract_strided_slice %133 {offsets = [0, 32], sizes = [2, 32], strides = [1, 1]} : vector<2x128xf32> to vector<2x32xf32>
    %137 = vector.extract_strided_slice %134 {offsets = [0, 64], sizes = [2, 32], strides = [1, 1]} : vector<2x128xf32> to vector<2x32xf32>
    %138 = vector.extract_strided_slice %133 {offsets = [0, 96], sizes = [2, 32], strides = [1, 1]} : vector<2x128xf32> to vector<2x32xf32>
    %139 = arith.mulf %136, %103 : vector<2x32xf32>
    %140 = arith.mulf %135, %137 : vector<2x32xf32>
    %141 = arith.addf %139, %140 : vector<2x32xf32>
    %142 = math.tanh %141 : vector<2x32xf32>
    %143 = arith.mulf %138, %142 : vector<2x32xf32>
    %144 = tpu.concatenate %143, %126 in 1 : vector<2x32xf32>, vector<2x32xf32> -> vector<2x64xf32>
    %cst_24 = arith.constant dense<0.000000e+00> : vector<2x256xf32>
    %145 = tpu.matmul %144, %2, %cst_24 {dimension_numbers = #tpu.dot_dimension_numbers<[1], [0], [0], [1], [0, 0, 1, 1], [], []>} : vector<2x64xf32>, vector<64x256xf32>, vector<2x256xf32> -> vector<2x256xf32>
    %146 = vector.extract_strided_slice %145 {offsets = [0, 0], sizes = [2, 128], strides = [1, 1]} : vector<2x256xf32> to vector<2x128xf32>
    %147 = vector.extract_strided_slice %145 {offsets = [0, 128], sizes = [2, 128], strides = [1, 1]} : vector<2x256xf32> to vector<2x128xf32>
    %148 = vector.broadcast %4 : vector<1x128xf32> to vector<2x128xf32>
    %149 = arith.addf %147, %148 : vector<2x128xf32>
    %150 = arith.negf %149 : vector<2x128xf32>
    %151 = math.exp %150 : vector<2x128xf32>
    %cst_25 = arith.constant 1.000000e+00 : f32
    %152 = vector.broadcast %cst_25 : f32 to vector<2x128xf32>
    %153 = arith.addf %152, %151 : vector<2x128xf32>
    %154 = arith.divf %152, %153 : vector<2x128xf32>
    %155 = math.tanh %149 : vector<2x128xf32>
    %156 = vector.extract_strided_slice %154 {offsets = [0, 0], sizes = [2, 32], strides = [1, 1]} : vector<2x128xf32> to vector<2x32xf32>
    %157 = vector.extract_strided_slice %154 {offsets = [0, 32], sizes = [2, 32], strides = [1, 1]} : vector<2x128xf32> to vector<2x32xf32>
    %158 = vector.extract_strided_slice %155 {offsets = [0, 64], sizes = [2, 32], strides = [1, 1]} : vector<2x128xf32> to vector<2x32xf32>
    %159 = vector.extract_strided_slice %154 {offsets = [0, 96], sizes = [2, 32], strides = [1, 1]} : vector<2x128xf32> to vector<2x32xf32>
    %160 = arith.mulf %157, %124 : vector<2x32xf32>
    %161 = arith.mulf %156, %158 : vector<2x32xf32>
    %162 = arith.addf %160, %161 : vector<2x32xf32>
    %163 = math.tanh %162 : vector<2x32xf32>
    %164 = arith.mulf %159, %163 : vector<2x32xf32>
    %165 = vector.extract_strided_slice %8 {offsets = [8, 0], sizes = [2, 128], strides = [1, 1]} : vector<16x128xf32> to vector<2x128xf32>
    %166 = arith.addf %165, %146 : vector<2x128xf32>
    %167 = arith.negf %166 : vector<2x128xf32>
    %168 = math.exp %167 : vector<2x128xf32>
    %cst_26 = arith.constant 1.000000e+00 : f32
    %169 = vector.broadcast %cst_26 : f32 to vector<2x128xf32>
    %170 = arith.addf %169, %168 : vector<2x128xf32>
    %171 = arith.divf %169, %170 : vector<2x128xf32>
    %172 = math.tanh %166 : vector<2x128xf32>
    %173 = vector.extract_strided_slice %171 {offsets = [0, 0], sizes = [2, 32], strides = [1, 1]} : vector<2x128xf32> to vector<2x32xf32>
    %174 = vector.extract_strided_slice %171 {offsets = [0, 32], sizes = [2, 32], strides = [1, 1]} : vector<2x128xf32> to vector<2x32xf32>
    %175 = vector.extract_strided_slice %172 {offsets = [0, 64], sizes = [2, 32], strides = [1, 1]} : vector<2x128xf32> to vector<2x32xf32>
    %176 = vector.extract_strided_slice %171 {offsets = [0, 96], sizes = [2, 32], strides = [1, 1]} : vector<2x128xf32> to vector<2x32xf32>
    %177 = arith.mulf %174, %141 : vector<2x32xf32>
    %178 = arith.mulf %173, %175 : vector<2x32xf32>
    %179 = arith.addf %177, %178 : vector<2x32xf32>
    %180 = math.tanh %179 : vector<2x32xf32>
    %181 = arith.mulf %176, %180 : vector<2x32xf32>
    %182 = tpu.concatenate %181, %164 in 1 : vector<2x32xf32>, vector<2x32xf32> -> vector<2x64xf32>
    %cst_27 = arith.constant dense<0.000000e+00> : vector<2x256xf32>
    %183 = tpu.matmul %182, %2, %cst_27 {dimension_numbers = #tpu.dot_dimension_numbers<[1], [0], [0], [1], [0, 0, 1, 1], [], []>} : vector<2x64xf32>, vector<64x256xf32>, vector<2x256xf32> -> vector<2x256xf32>
    %184 = vector.extract_strided_slice %183 {offsets = [0, 0], sizes = [2, 128], strides = [1, 1]} : vector<2x256xf32> to vector<2x128xf32>
    %185 = vector.extract_strided_slice %183 {offsets = [0, 128], sizes = [2, 128], strides = [1, 1]} : vector<2x256xf32> to vector<2x128xf32>
    %186 = vector.broadcast %4 : vector<1x128xf32> to vector<2x128xf32>
    %187 = arith.addf %185, %186 : vector<2x128xf32>
    %188 = arith.negf %187 : vector<2x128xf32>
    %189 = math.exp %188 : vector<2x128xf32>
    %cst_28 = arith.constant 1.000000e+00 : f32
    %190 = vector.broadcast %cst_28 : f32 to vector<2x128xf32>
    %191 = arith.addf %190, %189 : vector<2x128xf32>
    %192 = arith.divf %190, %191 : vector<2x128xf32>
    %193 = math.tanh %187 : vector<2x128xf32>
    %194 = vector.extract_strided_slice %192 {offsets = [0, 0], sizes = [2, 32], strides = [1, 1]} : vector<2x128xf32> to vector<2x32xf32>
    %195 = vector.extract_strided_slice %192 {offsets = [0, 32], sizes = [2, 32], strides = [1, 1]} : vector<2x128xf32> to vector<2x32xf32>
    %196 = vector.extract_strided_slice %193 {offsets = [0, 64], sizes = [2, 32], strides = [1, 1]} : vector<2x128xf32> to vector<2x32xf32>
    %197 = vector.extract_strided_slice %192 {offsets = [0, 96], sizes = [2, 32], strides = [1, 1]} : vector<2x128xf32> to vector<2x32xf32>
    %198 = arith.mulf %195, %162 : vector<2x32xf32>
    %199 = arith.mulf %194, %196 : vector<2x32xf32>
    %200 = arith.addf %198, %199 : vector<2x32xf32>
    %201 = math.tanh %200 : vector<2x32xf32>
    %202 = arith.mulf %197, %201 : vector<2x32xf32>
    %203 = vector.extract_strided_slice %8 {offsets = [10, 0], sizes = [2, 128], strides = [1, 1]} : vector<16x128xf32> to vector<2x128xf32>
    %204 = arith.addf %203, %184 : vector<2x128xf32>
    %205 = arith.negf %204 : vector<2x128xf32>
    %206 = math.exp %205 : vector<2x128xf32>
    %cst_29 = arith.constant 1.000000e+00 : f32
    %207 = vector.broadcast %cst_29 : f32 to vector<2x128xf32>
    %208 = arith.addf %207, %206 : vector<2x128xf32>
    %209 = arith.divf %207, %208 : vector<2x128xf32>
    %210 = math.tanh %204 : vector<2x128xf32>
    %211 = vector.extract_strided_slice %209 {offsets = [0, 0], sizes = [2, 32], strides = [1, 1]} : vector<2x128xf32> to vector<2x32xf32>
    %212 = vector.extract_strided_slice %209 {offsets = [0, 32], sizes = [2, 32], strides = [1, 1]} : vector<2x128xf32> to vector<2x32xf32>
    %213 = vector.extract_strided_slice %210 {offsets = [0, 64], sizes = [2, 32], strides = [1, 1]} : vector<2x128xf32> to vector<2x32xf32>
    %214 = vector.extract_strided_slice %209 {offsets = [0, 96], sizes = [2, 32], strides = [1, 1]} : vector<2x128xf32> to vector<2x32xf32>
    %215 = arith.mulf %212, %179 : vector<2x32xf32>
    %216 = arith.mulf %211, %213 : vector<2x32xf32>
    %217 = arith.addf %215, %216 : vector<2x32xf32>
    %218 = math.tanh %217 : vector<2x32xf32>
    %219 = arith.mulf %214, %218 : vector<2x32xf32>
    %220 = tpu.concatenate %219, %202 in 1 : vector<2x32xf32>, vector<2x32xf32> -> vector<2x64xf32>
    %cst_30 = arith.constant dense<0.000000e+00> : vector<2x256xf32>
    %221 = tpu.matmul %220, %2, %cst_30 {dimension_numbers = #tpu.dot_dimension_numbers<[1], [0], [0], [1], [0, 0, 1, 1], [], []>} : vector<2x64xf32>, vector<64x256xf32>, vector<2x256xf32> -> vector<2x256xf32>
    %222 = vector.extract_strided_slice %221 {offsets = [0, 0], sizes = [2, 128], strides = [1, 1]} : vector<2x256xf32> to vector<2x128xf32>
    %223 = vector.extract_strided_slice %221 {offsets = [0, 128], sizes = [2, 128], strides = [1, 1]} : vector<2x256xf32> to vector<2x128xf32>
    %224 = vector.broadcast %4 : vector<1x128xf32> to vector<2x128xf32>
    %225 = arith.addf %223, %224 : vector<2x128xf32>
    %226 = arith.negf %225 : vector<2x128xf32>
    %227 = math.exp %226 : vector<2x128xf32>
    %cst_31 = arith.constant 1.000000e+00 : f32
    %228 = vector.broadcast %cst_31 : f32 to vector<2x128xf32>
    %229 = arith.addf %228, %227 : vector<2x128xf32>
    %230 = arith.divf %228, %229 : vector<2x128xf32>
    %231 = math.tanh %225 : vector<2x128xf32>
    %232 = vector.extract_strided_slice %230 {offsets = [0, 0], sizes = [2, 32], strides = [1, 1]} : vector<2x128xf32> to vector<2x32xf32>
    %233 = vector.extract_strided_slice %230 {offsets = [0, 32], sizes = [2, 32], strides = [1, 1]} : vector<2x128xf32> to vector<2x32xf32>
    %234 = vector.extract_strided_slice %231 {offsets = [0, 64], sizes = [2, 32], strides = [1, 1]} : vector<2x128xf32> to vector<2x32xf32>
    %235 = vector.extract_strided_slice %230 {offsets = [0, 96], sizes = [2, 32], strides = [1, 1]} : vector<2x128xf32> to vector<2x32xf32>
    %236 = arith.mulf %233, %200 : vector<2x32xf32>
    %237 = arith.mulf %232, %234 : vector<2x32xf32>
    %238 = arith.addf %236, %237 : vector<2x32xf32>
    %239 = math.tanh %238 : vector<2x32xf32>
    %240 = arith.mulf %235, %239 : vector<2x32xf32>
    %241 = vector.extract_strided_slice %8 {offsets = [12, 0], sizes = [2, 128], strides = [1, 1]} : vector<16x128xf32> to vector<2x128xf32>
    %242 = arith.addf %241, %222 : vector<2x128xf32>
    %243 = arith.negf %242 : vector<2x128xf32>
    %244 = math.exp %243 : vector<2x128xf32>
    %cst_32 = arith.constant 1.000000e+00 : f32
    %245 = vector.broadcast %cst_32 : f32 to vector<2x128xf32>
    %246 = arith.addf %245, %244 : vector<2x128xf32>
    %247 = arith.divf %245, %246 : vector<2x128xf32>
    %248 = math.tanh %242 : vector<2x128xf32>
    %249 = vector.extract_strided_slice %247 {offsets = [0, 0], sizes = [2, 32], strides = [1, 1]} : vector<2x128xf32> to vector<2x32xf32>
    %250 = vector.extract_strided_slice %247 {offsets = [0, 32], sizes = [2, 32], strides = [1, 1]} : vector<2x128xf32> to vector<2x32xf32>
    %251 = vector.extract_strided_slice %248 {offsets = [0, 64], sizes = [2, 32], strides = [1, 1]} : vector<2x128xf32> to vector<2x32xf32>
    %252 = vector.extract_strided_slice %247 {offsets = [0, 96], sizes = [2, 32], strides = [1, 1]} : vector<2x128xf32> to vector<2x32xf32>
    %253 = arith.mulf %250, %217 : vector<2x32xf32>
    %254 = arith.mulf %249, %251 : vector<2x32xf32>
    %255 = arith.addf %253, %254 : vector<2x32xf32>
    %256 = math.tanh %255 : vector<2x32xf32>
    %257 = arith.mulf %252, %256 : vector<2x32xf32>
    %258 = tpu.concatenate %257, %240 in 1 : vector<2x32xf32>, vector<2x32xf32> -> vector<2x64xf32>
    %cst_33 = arith.constant dense<0.000000e+00> : vector<2x256xf32>
    %259 = tpu.matmul %258, %2, %cst_33 {dimension_numbers = #tpu.dot_dimension_numbers<[1], [0], [0], [1], [0, 0, 1, 1], [], []>} : vector<2x64xf32>, vector<64x256xf32>, vector<2x256xf32> -> vector<2x256xf32>
    %260 = vector.extract_strided_slice %259 {offsets = [0, 0], sizes = [2, 128], strides = [1, 1]} : vector<2x256xf32> to vector<2x128xf32>
    %261 = vector.extract_strided_slice %259 {offsets = [0, 128], sizes = [2, 128], strides = [1, 1]} : vector<2x256xf32> to vector<2x128xf32>
    %262 = vector.broadcast %4 : vector<1x128xf32> to vector<2x128xf32>
    %263 = arith.addf %261, %262 : vector<2x128xf32>
    %264 = arith.negf %263 : vector<2x128xf32>
    %265 = math.exp %264 : vector<2x128xf32>
    %cst_34 = arith.constant 1.000000e+00 : f32
    %266 = vector.broadcast %cst_34 : f32 to vector<2x128xf32>
    %267 = arith.addf %266, %265 : vector<2x128xf32>
    %268 = arith.divf %266, %267 : vector<2x128xf32>
    %269 = math.tanh %263 : vector<2x128xf32>
    %270 = vector.extract_strided_slice %268 {offsets = [0, 0], sizes = [2, 32], strides = [1, 1]} : vector<2x128xf32> to vector<2x32xf32>
    %271 = vector.extract_strided_slice %268 {offsets = [0, 32], sizes = [2, 32], strides = [1, 1]} : vector<2x128xf32> to vector<2x32xf32>
    %272 = vector.extract_strided_slice %269 {offsets = [0, 64], sizes = [2, 32], strides = [1, 1]} : vector<2x128xf32> to vector<2x32xf32>
    %273 = vector.extract_strided_slice %268 {offsets = [0, 96], sizes = [2, 32], strides = [1, 1]} : vector<2x128xf32> to vector<2x32xf32>
    %274 = arith.mulf %271, %238 : vector<2x32xf32>
    %275 = arith.mulf %270, %272 : vector<2x32xf32>
    %276 = arith.addf %274, %275 : vector<2x32xf32>
    %277 = math.tanh %276 : vector<2x32xf32>
    %278 = arith.mulf %273, %277 : vector<2x32xf32>
    %279 = vector.extract_strided_slice %8 {offsets = [14, 0], sizes = [2, 128], strides = [1, 1]} : vector<16x128xf32> to vector<2x128xf32>
    %280 = arith.addf %279, %260 : vector<2x128xf32>
    %281 = arith.negf %280 : vector<2x128xf32>
    %282 = math.exp %281 : vector<2x128xf32>
    %cst_35 = arith.constant 1.000000e+00 : f32
    %283 = vector.broadcast %cst_35 : f32 to vector<2x128xf32>
    %284 = arith.addf %283, %282 : vector<2x128xf32>
    %285 = arith.divf %283, %284 : vector<2x128xf32>
    %286 = math.tanh %280 : vector<2x128xf32>
    %287 = vector.extract_strided_slice %285 {offsets = [0, 0], sizes = [2, 32], strides = [1, 1]} : vector<2x128xf32> to vector<2x32xf32>
    %288 = vector.extract_strided_slice %285 {offsets = [0, 32], sizes = [2, 32], strides = [1, 1]} : vector<2x128xf32> to vector<2x32xf32>
    %289 = vector.extract_strided_slice %286 {offsets = [0, 64], sizes = [2, 32], strides = [1, 1]} : vector<2x128xf32> to vector<2x32xf32>
    %290 = vector.extract_strided_slice %285 {offsets = [0, 96], sizes = [2, 32], strides = [1, 1]} : vector<2x128xf32> to vector<2x32xf32>
    %291 = arith.mulf %288, %255 : vector<2x32xf32>
    %292 = arith.mulf %287, %289 : vector<2x32xf32>
    %293 = arith.addf %291, %292 : vector<2x32xf32>
    %294 = math.tanh %293 : vector<2x32xf32>
    %295 = arith.mulf %290, %294 : vector<2x32xf32>
    %296 = tpu.concatenate %295, %278 in 1 : vector<2x32xf32>, vector<2x32xf32> -> vector<2x64xf32>
    %cst_36 = arith.constant dense<0.000000e+00> : vector<2x256xf32>
    %297 = tpu.matmul %296, %2, %cst_36 {dimension_numbers = #tpu.dot_dimension_numbers<[1], [0], [0], [1], [0, 0, 1, 1], [], []>} : vector<2x64xf32>, vector<64x256xf32>, vector<2x256xf32> -> vector<2x256xf32>
    %298 = vector.extract_strided_slice %297 {offsets = [0, 128], sizes = [2, 128], strides = [1, 1]} : vector<2x256xf32> to vector<2x128xf32>
    %299 = vector.broadcast %4 : vector<1x128xf32> to vector<2x128xf32>
    %300 = arith.addf %298, %299 : vector<2x128xf32>
    %301 = arith.negf %300 : vector<2x128xf32>
    %302 = math.exp %301 : vector<2x128xf32>
    %cst_37 = arith.constant 1.000000e+00 : f32
    %303 = vector.broadcast %cst_37 : f32 to vector<2x128xf32>
    %304 = arith.addf %303, %302 : vector<2x128xf32>
    %305 = arith.divf %303, %304 : vector<2x128xf32>
    %306 = math.tanh %300 : vector<2x128xf32>
    %307 = vector.extract_strided_slice %305 {offsets = [0, 0], sizes = [2, 32], strides = [1, 1]} : vector<2x128xf32> to vector<2x32xf32>
    %308 = vector.extract_strided_slice %305 {offsets = [0, 32], sizes = [2, 32], strides = [1, 1]} : vector<2x128xf32> to vector<2x32xf32>
    %309 = vector.extract_strided_slice %306 {offsets = [0, 64], sizes = [2, 32], strides = [1, 1]} : vector<2x128xf32> to vector<2x32xf32>
    %310 = vector.extract_strided_slice %305 {offsets = [0, 96], sizes = [2, 32], strides = [1, 1]} : vector<2x128xf32> to vector<2x32xf32>
    %311 = arith.mulf %308, %276 : vector<2x32xf32>
    %312 = arith.mulf %307, %309 : vector<2x32xf32>
    %313 = arith.addf %311, %312 : vector<2x32xf32>
    %314 = math.tanh %313 : vector<2x32xf32>
    %315 = arith.mulf %310, %314 : vector<2x32xf32>
    %316 = tpu.concatenate %50, %88, %126, %164, %202, %240, %278, %315, %295, %315, %293, %313 in 1 : vector<2x32xf32>, vector<2x32xf32>, vector<2x32xf32>, vector<2x32xf32>, vector<2x32xf32>, vector<2x32xf32>, vector<2x32xf32>, vector<2x32xf32>, vector<2x32xf32>, vector<2x32xf32>, vector<2x32xf32>, vector<2x32xf32> -> vector<2x384xf32>
    %c0_38 = arith.constant 0 : index
    %c0_39 = arith.constant 0 : index
    %317 = vector.load %arg6[%c0_38, %c0_39] : memref<2x384xf32, #tpu.memory_space<vmem>>, vector<2x384xf32>
    tpu.vector_store %arg6[%c0_38, %c0_39], %316 {strides = array<i32>} : memref<2x384xf32, #tpu.memory_space<vmem>>, vector<2x384xf32>,
    return
  }
  func.func @transform_0(%arg0: i32) -> (i32, i32, i32) {
    %c0_i32 = arith.constant 0 : i32
    %c0_i32_0 = arith.constant 0 : i32
    %c0_i32_1 = arith.constant 0 : i32
    return %c0_i32, %arg0, %c0_i32_0 : i32, i32, i32
  }
  func.func @transform_1(%arg0: i32) -> (i32, i32) {
    %c0_i32 = arith.constant 0 : i32
    %c0_i32_0 = arith.constant 0 : i32
    %c0_i32_1 = arith.constant 0 : i32
    return %c0_i32, %c0_i32_0 : i32, i32
  }
  func.func @transform_2(%arg0: i32) -> (i32, i32) {
    %c0_i32 = arith.constant 0 : i32
    %c0_i32_0 = arith.constant 0 : i32
    %c0_i32_1 = arith.constant 0 : i32
    return %c0_i32, %c0_i32_0 : i32, i32
  }
  func.func @transform_3(%arg0: i32) -> (i32, i32) {
    %c0_i32 = arith.constant 0 : i32
    %c0_i32_0 = arith.constant 0 : i32
    %c0_i32_1 = arith.constant 0 : i32
    return %c0_i32, %c0_i32_0 : i32, i32
  }
  func.func @transform_4(%arg0: i32) -> (i32, i32) {
    %c0_i32 = arith.constant 0 : i32
    %c0_i32_0 = arith.constant 0 : i32
    %c0_i32_1 = arith.constant 0 : i32
    return %c0_i32, %c0_i32_0 : i32, i32
  }
  func.func @transform_5(%arg0: i32) -> (i32, i32) {
    %c0_i32 = arith.constant 0 : i32
    %c0_i32_0 = arith.constant 0 : i32
    return %arg0, %c0_i32 : i32, i32
  }
}

</mosaic_0001>

<llo_original>
// kernel: tpu_custom_call.1
$region0: #{tpu_custom_call.1}
  #allocation0 [shape = 'u32[]', space=smem, size = 0x4, offset = 0x4, fixed_abs, tag = 'smem constant byte address 0x4 - core index']
  #allocation1 [shape = 'u32[144,128]{1,0:T(1,128)}', space=vmem, size = 0x12000, scoped, tag = 'internal scratch']
  %s0 = inlined_call_operand.vmem [shape: f32[8,2,4], index: 0, kind: input, shape index: {}]
  %s1 = inlined_call_operand.vmem [shape: f32[4,128], index: 1, kind: input, shape index: {}]
  %s2 = inlined_call_operand.vmem [shape: f32[1,128], index: 2, kind: input, shape index: {}]
  %s3 = inlined_call_operand.hbm [shape: f32[64,256], index: 3, kind: input, shape index: {}]
  %s4 = inlined_call_operand.vmem [shape: f32[1,128], index: 4, kind: input, shape index: {}]
  %s5 = inlined_call_operand.hbm [shape: f32[2,384], index: 5, kind: output, shape index: {}]
  %s6 = sld [smem:[#allocation0]]
  $region34: #{tpu_custom_call.1} parent=0
    _
  %s8 = ssub.s32 1, %s6
  %s9 = scalar_select 0, %s8, %s6
  $region1: #{tpu_custom_call.1} parent=0
    #allocation2 [shape = 'u8[65536]{0}', space=vmem, size = 0x10000, scoped, tag = 'input window, operand 3, single buffered']
    #allocation3 [shape = 's32[1]{0}', space=sflag, size = 0x4, scoped, tag = 'scoped memory for tpu_custom_call.1']
    #allocation4 [shape = 's32[1]{0}', space=sflag, size = 0x4, scoped, tag = 'scoped memory for tpu_custom_call.1']
    #allocation5 [shape = 'u8[3072]{0}', space=vmem, size = 0xc00, scoped, tag = 'output window, operand 0, single buffered']
    %10 = vsyncpa [#allocation3], 0
    %11 = vsyncpa [#allocation4], 0
    // Predicated region
    $region2: #{tpu_custom_call.1} parent=1 // pred_check
      _
    $region3: #{tpu_custom_call.1} parent=1 // pred_check_branch
      %13 = sbr.rel (0) target = $region5
    $region4: #{tpu_custom_call.1} parent=1 // pred_region
      _
    $region5: #{tpu_custom_call.1} parent=1 // pred_fallthru
      _
    // Predicated region
    $region6: #{tpu_custom_call.1} parent=1 // pred_check
      _
    $region7: #{tpu_custom_call.1} parent=1 // pred_check_branch
      %15 = sbr.rel (0) target = $region9
    $region8: #{tpu_custom_call.1} parent=1 // pred_region
      _
    $region9: #{tpu_custom_call.1} parent=1 // pred_fallthru
      _
    // Predicated region
    $region10: #{tpu_custom_call.1} parent=1 // pred_check
      _
    $region11: #{tpu_custom_call.1} parent=1 // pred_check_branch
      %17 = sbr.rel (0) target = $region13
    $region12: #{tpu_custom_call.1} parent=1 // pred_region
      _
    $region13: #{tpu_custom_call.1} parent=1 // pred_fallthru
      _
    // Predicated region
    $region14: #{tpu_custom_call.1} parent=1 // pred_check
      _
    $region15: #{tpu_custom_call.1} parent=1 // pred_check_branch
      %19 = sbr.rel (0) target = $region17
    $region16: #{tpu_custom_call.1} parent=1 // pred_region
      %s21 = ssub.s32 2048, 2048
      %22 = vsyncadd [#allocation3], %s21
      %s23 = sshll.u32 [#allocation2], 4
      %s24 = int_to_ptr.vmem [resolvable:$true] %s23
      %29 = dma.hbm_to_vmem [thread:$0]  %s3, 2048, %s24, [#allocation3], 256, 256, 16
    $region17: #{tpu_custom_call.1} parent=1 // pred_fallthru
      _
    // Predicated region
    $region18: #{tpu_custom_call.1} parent=1 // pred_check
      _
    $region19: #{tpu_custom_call.1} parent=1 // pred_check_branch
      %31 = sbr.rel (0) target = $region21
    $region20: #{tpu_custom_call.1} parent=1 // pred_region
      _
    $region21: #{tpu_custom_call.1} parent=1 // pred_fallthru
      _
    // Predicated region
    $region22: #{tpu_custom_call.1} parent=1 // pred_check
      _
    $region23: #{tpu_custom_call.1} parent=1 // pred_check_branch
      %33 = sbr.rel (0) target = $region25
    $region24: #{tpu_custom_call.1} parent=1 // pred_region
      %34 = dma.done [#allocation3], 2048
    $region25: #{tpu_custom_call.1} parent=1 // pred_fallthru
      _
    %v35 = vld [vmem:[%s0] sm:$0x3]
    %v36 = vld [vmem:[%s0 + $0x2] sm:$0x3]
    %v37 = vld [vmem:[%s0 + $0x4] sm:$0x3]
    %v38 = vld [vmem:[%s0 + $0x6] sm:$0x3]
    %v39 = vld [vmem:[%s0 + $0x8] sm:$0x3]
    %v40 = vld [vmem:[%s0 + $0xa] sm:$0x3]
    %v41 = vld [vmem:[%s0 + $0xc] sm:$0x3]
    %v42 = vld [vmem:[%s0 + $0xe] sm:$0x3]
    %v43 = vld [vmem:[%s1] sm:$0xf]
    %v44 = vld [vmem:[#allocation2] sm:$0xff]
    %v45 = vld [vmem:[#allocation2 + $0x8] sm:$0xff]
    %v46 = vld [vmem:[#allocation2 + $0x10] sm:$0xff]
    %v47 = vld [vmem:[#allocation2 + $0x18] sm:$0xff]
    %v48 = vld [vmem:[#allocation2 + $0x20] sm:$0xff]
    %v49 = vld [vmem:[#allocation2 + $0x28] sm:$0xff]
    %v50 = vld [vmem:[#allocation2 + $0x30] sm:$0xff]
    %v51 = vld [vmem:[#allocation2 + $0x38] sm:$0xff]
    %v52 = vld [vmem:[#allocation2 + $0x40] sm:$0xff]
    %v53 = vld [vmem:[#allocation2 + $0x48] sm:$0xff]
    %v54 = vld [vmem:[#allocation2 + $0x50] sm:$0xff]
    %v55 = vld [vmem:[#allocation2 + $0x58] sm:$0xff]
    %v56 = vld [vmem:[#allocation2 + $0x60] sm:$0xff]
    %v57 = vld [vmem:[#allocation2 + $0x68] sm:$0xff]
    %v58 = vld [vmem:[#allocation2 + $0x70] sm:$0xff]
    %v59 = vld [vmem:[#allocation2 + $0x78] sm:$0xff]
    %v60 = vld [vmem:[%s2] sm:$0x1]
    %v61 = vld [vmem:[%s4] sm:$0x1]
    %v63 = vlaneseq
    %v64 = vshrl.u32 %v63, 7
    %v65 = vsub.s32 0, %v64
    %v66 = vrot.slane %v60, %v65
    %v76 = vcombine.low %v35, %v36
    %v77 = vcombine.low %v37, %v38
    %v79 = vunpack.c.l.s4 1983009808
    %v80 = vunpack.c.0.s8 %v79
    %v81 = vlaneseq
    %v82 = vshrl.u32 %v81, 7
    %v83 = vsub.s32 %v80, %v82
    %v84 = vrot.slane %v76, %v83
    %v86 = vunpack.c.l.s4 1983009808
    %v87 = vunpack.c.0.s8 %v86
    %v88 = vlaneseq
    %v89 = vshrl.u32 %v88, 7
    %v90 = vsub.s32 %v87, %v89
    %v91 = vrot.slane %v77, %v90
    %v92 = vcombine.low %v84, %v91
    %v93 = vcombine.low %v39, %v40
    %v94 = vcombine.low %v41, %v42
    %v96 = vunpack.c.l.s4 1983009808
    %v97 = vunpack.c.0.s8 %v96
    %v98 = vlaneseq
    %v99 = vshrl.u32 %v98, 7
    %v100 = vsub.s32 %v97, %v99
    %v101 = vrot.slane %v93, %v100
    %v103 = vunpack.c.l.s4 1983009808
    %v104 = vunpack.c.0.s8 %v103
    %v105 = vlaneseq
    %v106 = vshrl.u32 %v105, 7
    %v107 = vsub.s32 %v104, %v106
    %v108 = vrot.slane %v94, %v107
    %v109 = vcombine.low %v101, %v108
    %vm110 = vcmask 31744
    %v111 = vsel %vm110, %v92, 0
    %v113 = vsel %vm110, %v109, 0
    %vm115 = vcmask 1043456
    %v117 = vsel %vm115, %v43, 0
    %119 = vmatprep.subr.mxu0 0.0
    %120 = vmatpush1.msra.mxu0 %v117
    %121 = vmatprep.subr.mxu0 0.0
    %122 = vmatpush1.msra.mxu0 0.0
    %123 = vmatprep.subr.mxu0 0.0
    %124 = vmatpush1.msra.mxu0 0.0
    %125 = vmatprep.subr.mxu0 0.0
    %126 = vmatpush1.msra.mxu0 0.0
    %127 = vmatprep.subr.mxu0 0.0
    %128 = vmatpush1.msra.mxu0 0.0
    %129 = vmatprep.subr.mxu0 0.0
    %130 = vmatpush1.msra.mxu0 0.0
    %131 = vmatprep.subr.mxu0 0.0
    %132 = vmatpush1.msra.mxu0 0.0
    %133 = vmatprep.subr.mxu0 0.0
    %134 = vmatpush1.msra.mxu0 0.0
    %135 = vmatprep.subr.mxu0 0.0
    %136 = vmatpush1.msra.mxu0 0.0
    %137 = vmatprep.subr.mxu0 0.0
    %138 = vmatpush1.msra.mxu0 0.0
    %139 = vmatprep.subr.mxu0 0.0
    %140 = vmatpush1.msra.mxu0 0.0
    %141 = vmatprep.subr.mxu0 0.0
    %142 = vmatpush1.msra.mxu0 0.0
    %143 = vmatprep.subr.mxu0 0.0
    %144 = vmatpush1.msra.mxu0 0.0
    %145 = vmatprep.subr.mxu0 0.0
    %146 = vmatpush1.msra.mxu0 0.0
    %147 = vmatprep.subr.mxu0 0.0
    %148 = vmatpush1.msra.mxu0 0.0
    %149 = vmatprep.subr.mxu0 0.0
    %150 = vmatpush1.msra.mxu0 0.0
    %151 = vmatprep.subr.mxu0 0.0
    %152 = vmatpush1.msra.mxu0 0.0
    %153 = vmatprep.subr.mxu0 0.0
    %154 = vmatpush1.msra.mxu0 0.0
    %155 = vmatprep.subr.mxu0 0.0
    %156 = vmatpush1.msra.mxu0 0.0
    %157 = vmatprep.subr.mxu0 0.0
    %158 = vmatpush1.msra.mxu0 0.0
    %159 = vmatprep.subr.mxu0 0.0
    %160 = vmatpush1.msra.mxu0 0.0
    %161 = vmatprep.subr.mxu0 0.0
    %162 = vmatpush1.msra.mxu0 0.0
    %163 = vmatprep.subr.mxu0 0.0
    %164 = vmatpush1.msra.mxu0 0.0
    %165 = vmatprep.subr.mxu0 0.0
    %166 = vmatpush1.msra.mxu0 0.0
    %167 = vmatprep.subr.mxu0 0.0
    %168 = vmatpush1.msra.mxu0 0.0
    %169 = vmatprep.subr.mxu0 0.0
    %170 = vmatpush1.msra.mxu0 0.0
    %171 = vmatprep.subr.mxu0 0.0
    %172 = vmatpush1.msra.mxu0 0.0
    %173 = vmatprep.subr.mxu0 0.0
    %174 = vmatpush1.msra.mxu0 0.0
    %175 = vmatprep.subr.mxu0 0.0
    %176 = vmatpush1.msra.mxu0 0.0
    %177 = vmatprep.subr.mxu0 0.0
    %178 = vmatpush1.msra.mxu0 0.0
    %179 = vmatprep.subr.mxu0 0.0
    %180 = vmatpush1.msra.mxu0 0.0
    %181 = vmatprep.subr.mxu0 0.0
    %182 = vmatpush1.msra.mxu0 0.0
    %183 = vmatprep.mubr.f32.mxu0 0.0
    %184 = vmatmul.mubr.f32.gmra.mrb[0].mxu0 %v111
    %v185 = vpop.f32.mrb[0].mxu0
    %v186 = vadd.f32 %v66, %v185
    %v187 = vpop.f32.mrb[0].mxu0
    %188 = vmatprep.mubr.f32.mxu0 0.0
    %189 = vmatmul.mubr.f32.gmra.mrb[0].mxu0 %v113
    %v190 = vpop.f32.mrb[0].mxu0
    %v191 = vadd.f32 %v66, %v190
    %v192 = vpop.f32.mrb[0].mxu0
    %193 = vdwg.mxu0
    %v194 = vadd.f32 %v186, 0.0
    %v195 = vxor.u32 %v194, 2147483648
    %v196 = vmul.f32 %v195, 1.442695
    %v197 = vpow.pop %v196
    %v198 = vadd.f32 %v197, 1.0
    %v199 = vrcp.pop %v198
    %v200 = vmul.f32 1.0, %v199
    %v201 = vtanh.pop %v194
    %v202 = vmul.f32 %v200, 0.0
    %204 = vrot.lane.b32.xlu0 %v201, 64
    %v205 = vpop.permute.xlu0 %204
    %v207 = vmul.f32 %v200, %v205
    %209 = vrot.lane.b32.xlu0 %v207, 32
    %v210 = vpop.permute.xlu0 %209
    %v212 = vadd.f32 %v202, %v210
    %v213 = vtanh.pop %v212
    %215 = vrot.lane.b32.xlu0 %v213, 64
    %v216 = vpop.permute.xlu0 %215
    %v218 = vmul.f32 %v200, %v216
    %220 = vrot.lane.b32.xlu0 %v218, 32
    %v221 = vpop.permute.xlu0 %220
    %vm223 = vcmask 261120
    %v224 = vsel %vm223, %v221, 0.0
    %vm225 = vcmask 523264
    %v227 = vsel %vm225, %v224, 0
    %229 = vmatprep.subr.mxu0 %v45
    %230 = vmatpush1.msra.mxu0 %v44
    %231 = vmatprep.subr.mxu0 %v47
    %232 = vmatpush1.msra.mxu0 %v46
    %233 = vmatprep.subr.mxu0 %v49
    %234 = vmatpush1.msra.mxu0 %v48
    %235 = vmatprep.subr.mxu0 %v51
    %236 = vmatpush1.msra.mxu0 %v50
    %237 = vmatprep.subr.mxu0 %v53
    %238 = vmatpush1.msra.mxu0 %v52
    %239 = vmatprep.subr.mxu0 %v55
    %240 = vmatpush1.msra.mxu0 %v54
    %241 = vmatprep.subr.mxu0 %v57
    %242 = vmatpush1.msra.mxu0 %v56
    %243 = vmatprep.subr.mxu0 %v59
    %244 = vmatpush1.msra.mxu0 %v58
    %245 = vmatprep.subr.mxu0 0.0
    %246 = vmatpush1.msra.mxu0 0.0
    %247 = vmatprep.subr.mxu0 0.0
    %248 = vmatpush1.msra.mxu0 0.0
    %249 = vmatprep.subr.mxu0 0.0
    %250 = vmatpush1.msra.mxu0 0.0
    %251 = vmatprep.subr.mxu0 0.0
    %252 = vmatpush1.msra.mxu0 0.0
    %253 = vmatprep.subr.mxu0 0.0
    %254 = vmatpush1.msra.mxu0 0.0
    %255 = vmatprep.subr.mxu0 0.0
    %256 = vmatpush1.msra.mxu0 0.0
    %257 = vmatprep.subr.mxu0 0.0
    %258 = vmatpush1.msra.mxu0 0.0
    %259 = vmatprep.subr.mxu0 0.0
    %260 = vmatpush1.msra.mxu0 0.0
    %261 = vmatprep.subr.mxu0 0.0
    %262 = vmatpush1.msra.mxu0 0.0
    %263 = vmatprep.subr.mxu0 0.0
    %264 = vmatpush1.msra.mxu0 0.0
    %265 = vmatprep.subr.mxu0 0.0
    %266 = vmatpush1.msra.mxu0 0.0
    %267 = vmatprep.subr.mxu0 0.0
    %268 = vmatpush1.msra.mxu0 0.0
    %269 = vmatprep.subr.mxu0 0.0
    %270 = vmatpush1.msra.mxu0 0.0
    %271 = vmatprep.subr.mxu0 0.0
    %272 = vmatpush1.msra.mxu0 0.0
    %273 = vmatprep.subr.mxu0 0.0
    %274 = vmatpush1.msra.mxu0 0.0
    %275 = vmatprep.subr.mxu0 0.0
    %276 = vmatpush1.msra.mxu0 0.0
    %277 = vmatprep.subr.mxu0 0.0
    %278 = vmatpush1.msra.mxu0 0.0
    %279 = vmatprep.subr.mxu0 0.0
    %280 = vmatpush1.msra.mxu0 0.0
    %281 = vmatprep.subr.mxu0 0.0
    %282 = vmatpush1.msra.mxu0 0.0
    %283 = vmatprep.subr.mxu0 0.0
    %284 = vmatpush1.msra.mxu0 0.0
    %285 = vmatprep.subr.mxu0 0.0
    %286 = vmatpush1.msra.mxu0 0.0
    %287 = vmatprep.subr.mxu0 0.0
    %288 = vmatpush1.msra.mxu0 0.0
    %289 = vmatprep.subr.mxu0 0.0
    %290 = vmatpush1.msra.mxu0 0.0
    %291 = vmatprep.subr.mxu0 0.0
    %292 = vmatpush1.msra.mxu0 0.0
    %293 = vmatprep.mubr.f32.mxu0 0.0
    %294 = vmatmul.mubr.f32.gmra.mrb[0].mxu0 %v227
    %v295 = vpop.f32.mrb[0].mxu0
    %v296 = vadd.f32 0.0, %v295
    %v297 = vpop.f32.mrb[0].mxu0
    %v298 = vadd.f32 0.0, %v297
    %299 = vdwg.mxu0
    %v301 = vlaneseq
    %v302 = vshrl.u32 %v301, 7
    %v303 = vsub.s32 0, %v302
    %v304 = vrot.slane %v61, %v303
    %v306 = vadd.f32 %v298, %v304
    %v307 = vxor.u32 %v306, 2147483648
    %v308 = vmul.f32 %v307, 1.442695
    %v309 = vpow.pop %v308
    %v310 = vadd.f32 %v309, 1.0
    %v311 = vrcp.pop %v310
    %v312 = vmul.f32 1.0, %v311
    %v313 = vtanh.pop %v306
    %v314 = vmul.f32 %v312, 0.0
    %316 = vrot.lane.b32.xlu0 %v313, 64
    %v317 = vpop.permute.xlu0 %316
    %v319 = vmul.f32 %v312, %v317
    %321 = vrot.lane.b32.xlu0 %v319, 32
    %v322 = vpop.permute.xlu0 %321
    %v324 = vadd.f32 %v314, %v322
    %v325 = vtanh.pop %v324
    %327 = vrot.lane.b32.xlu0 %v325, 64
    %v328 = vpop.permute.xlu0 %327
    %v330 = vmul.f32 %v312, %v328
    %v332 = vrot.slane %v296, 6
    %v334 = vadd.f32 %v186, %v332
    %v335 = vxor.u32 %v334, 2147483648
    %v336 = vmul.f32 %v335, 1.442695
    %v337 = vpow.pop %v336
    %v338 = vadd.f32 %v337, 1.0
    %v339 = vrcp.pop %v338
    %v340 = vmul.f32 1.0, %v339
    %v341 = vtanh.pop %v334
    %v343 = vrot.slane %v212, 6
    %v345 = vmul.f32 %v340, %v343
    %347 = vrot.lane.b32.xlu0 %v341, 64
    %v348 = vpop.permute.xlu0 %347
    %v350 = vmul.f32 %v340, %v348
    %352 = vrot.lane.b32.xlu0 %v350, 32
    %v353 = vpop.permute.xlu0 %352
    %v355 = vadd.f32 %v345, %v353
    %v356 = vtanh.pop %v355
    %358 = vrot.lane.b32.xlu0 %v356, 64
    %v359 = vpop.permute.xlu0 %358
    %v361 = vmul.f32 %v340, %v359
    %363 = vrot.lane.b32.xlu0 %v361, 32
    %v364 = vpop.permute.xlu0 %363
    %v367 = vrot.slane %v330, 6
    %368 = vrot.lane.b32.xlu0 %v367, 64
    %v369 = vpop.permute.xlu0 %368
    %v371 = vsel %vm223, %v364, %v369
    %v373 = vrot.slane %v371, 2
    %v374 = vsel %vm225, %v373, 0
    %376 = vmatprep.subr.mxu0 %v45
    %377 = vmatpush1.msra.mxu0 %v44
    %378 = vmatprep.subr.mxu0 %v47
    %379 = vmatpush1.msra.mxu0 %v46
    %380 = vmatprep.subr.mxu0 %v49
    %381 = vmatpush1.msra.mxu0 %v48
    %382 = vmatprep.subr.mxu0 %v51
    %383 = vmatpush1.msra.mxu0 %v50
    %384 = vmatprep.subr.mxu0 %v53
    %385 = vmatpush1.msra.mxu0 %v52
    %386 = vmatprep.subr.mxu0 %v55
    %387 = vmatpush1.msra.mxu0 %v54
    %388 = vmatprep.subr.mxu0 %v57
    %389 = vmatpush1.msra.mxu0 %v56
    %390 = vmatprep.subr.mxu0 %v59
    %391 = vmatpush1.msra.mxu0 %v58
    %392 = vmatprep.subr.mxu0 0.0
    %393 = vmatpush1.msra.mxu0 0.0
    %394 = vmatprep.subr.mxu0 0.0
    %395 = vmatpush1.msra.mxu0 0.0
    %396 = vmatprep.subr.mxu0 0.0
    %397 = vmatpush1.msra.mxu0 0.0
    %398 = vmatprep.subr.mxu0 0.0
    %399 = vmatpush1.msra.mxu0 0.0
    %400 = vmatprep.subr.mxu0 0.0
    %401 = vmatpush1.msra.mxu0 0.0
    %402 = vmatprep.subr.mxu0 0.0
    %403 = vmatpush1.msra.mxu0 0.0
    %404 = vmatprep.subr.mxu0 0.0
    %405 = vmatpush1.msra.mxu0 0.0
    %406 = vmatprep.subr.mxu0 0.0
    %407 = vmatpush1.msra.mxu0 0.0
    %408 = vmatprep.subr.mxu0 0.0
    %409 = vmatpush1.msra.mxu0 0.0
    %410 = vmatprep.subr.mxu0 0.0
    %411 = vmatpush1.msra.mxu0 0.0
    %412 = vmatprep.subr.mxu0 0.0
    %413 = vmatpush1.msra.mxu0 0.0
    %414 = vmatprep.subr.mxu0 0.0
    %415 = vmatpush1.msra.mxu0 0.0
    %416 = vmatprep.subr.mxu0 0.0
    %417 = vmatpush1.msra.mxu0 0.0
    %418 = vmatprep.subr.mxu0 0.0
    %419 = vmatpush1.msra.mxu0 0.0
    %420 = vmatprep.subr.mxu0 0.0
    %421 = vmatpush1.msra.mxu0 0.0
    %422 = vmatprep.subr.mxu0 0.0
    %423 = vmatpush1.msra.mxu0 0.0
    %424 = vmatprep.subr.mxu0 0.0
    %425 = vmatpush1.msra.mxu0 0.0
    %426 = vmatprep.subr.mxu0 0.0
    %427 = vmatpush1.msra.mxu0 0.0
    %428 = vmatprep.subr.mxu0 0.0
    %429 = vmatpush1.msra.mxu0 0.0
    %430 = vmatprep.subr.mxu0 0.0
    %431 = vmatpush1.msra.mxu0 0.0
    %432 = vmatprep.subr.mxu0 0.0
    %433 = vmatpush1.msra.mxu0 0.0
    %434 = vmatprep.subr.mxu0 0.0
    %435 = vmatpush1.msra.mxu0 0.0
    %436 = vmatprep.subr.mxu0 0.0
    %437 = vmatpush1.msra.mxu0 0.0
    %438 = vmatprep.subr.mxu0 0.0
    %439 = vmatpush1.msra.mxu0 0.0
    %440 = vmatprep.mubr.f32.mxu0 0.0
    %441 = vmatmul.mubr.f32.gmra.mrb[0].mxu0 %v374
    %v442 = vpop.f32.mrb[0].mxu0
    %v443 = vadd.f32 0.0, %v442
    %v444 = vpop.f32.mrb[0].mxu0
    %v445 = vadd.f32 0.0, %v444
    %446 = vdwg.mxu0
    %v447 = vadd.f32 %v445, %v304
    %v448 = vxor.u32 %v447, 2147483648
    %v449 = vmul.f32 %v448, 1.442695
    %v450 = vpow.pop %v449
    %v451 = vadd.f32 %v450, 1.0
    %v452 = vrcp.pop %v451
    %v453 = vmul.f32 1.0, %v452
    %v454 = vtanh.pop %v447
    %v455 = vmul.f32 %v453, %v324
    %457 = vrot.lane.b32.xlu0 %v454, 64
    %v458 = vpop.permute.xlu0 %457
    %v460 = vmul.f32 %v453, %v458
    %462 = vrot.lane.b32.xlu0 %v460, 32
    %v463 = vpop.permute.xlu0 %462
    %v465 = vadd.f32 %v455, %v463
    %v466 = vtanh.pop %v465
    %468 = vrot.lane.b32.xlu0 %v466, 64
    %v469 = vpop.permute.xlu0 %468
    %v471 = vmul.f32 %v453, %v469
    %v473 = vrot.slane %v443, 4
    %v475 = vadd.f32 %v186, %v473
    %v476 = vxor.u32 %v475, 2147483648
    %v477 = vmul.f32 %v476, 1.442695
    %v478 = vpow.pop %v477
    %v479 = vadd.f32 %v478, 1.0
    %v480 = vrcp.pop %v479
    %v481 = vmul.f32 1.0, %v480
    %v482 = vtanh.pop %v475
    %v484 = vrot.slane %v355, 6
    %v486 = vmul.f32 %v481, %v484
    %488 = vrot.lane.b32.xlu0 %v482, 64
    %v489 = vpop.permute.xlu0 %488
    %v491 = vmul.f32 %v481, %v489
    %493 = vrot.lane.b32.xlu0 %v491, 32
    %v494 = vpop.permute.xlu0 %493
    %v496 = vadd.f32 %v486, %v494
    %v497 = vtanh.pop %v496
    %499 = vrot.lane.b32.xlu0 %v497, 64
    %v500 = vpop.permute.xlu0 %499
    %v502 = vmul.f32 %v481, %v500
    %504 = vrot.lane.b32.xlu0 %v502, 32
    %v505 = vpop.permute.xlu0 %504
    %v508 = vrot.slane %v471, 4
    %509 = vrot.lane.b32.xlu0 %v508, 64
    %v510 = vpop.permute.xlu0 %509
    %v512 = vsel %vm223, %v505, %v510
    %v514 = vrot.slane %v512, 4
    %v515 = vsel %vm225, %v514, 0
    %517 = vmatprep.subr.mxu0 %v45
    %518 = vmatpush1.msra.mxu0 %v44
    %519 = vmatprep.subr.mxu0 %v47
    %520 = vmatpush1.msra.mxu0 %v46
    %521 = vmatprep.subr.mxu0 %v49
    %522 = vmatpush1.msra.mxu0 %v48
    %523 = vmatprep.subr.mxu0 %v51
    %524 = vmatpush1.msra.mxu0 %v50
    %525 = vmatprep.subr.mxu0 %v53
    %526 = vmatpush1.msra.mxu0 %v52
    %527 = vmatprep.subr.mxu0 %v55
    %528 = vmatpush1.msra.mxu0 %v54
    %529 = vmatprep.subr.mxu0 %v57
    %530 = vmatpush1.msra.mxu0 %v56
    %531 = vmatprep.subr.mxu0 %v59
    %532 = vmatpush1.msra.mxu0 %v58
    %533 = vmatprep.subr.mxu0 0.0
    %534 = vmatpush1.msra.mxu0 0.0
    %535 = vmatprep.subr.mxu0 0.0
    %536 = vmatpush1.msra.mxu0 0.0
    %537 = vmatprep.subr.mxu0 0.0
    %538 = vmatpush1.msra.mxu0 0.0
    %539 = vmatprep.subr.mxu0 0.0
    %540 = vmatpush1.msra.mxu0 0.0
    %541 = vmatprep.subr.mxu0 0.0
    %542 = vmatpush1.msra.mxu0 0.0
    %543 = vmatprep.subr.mxu0 0.0
    %544 = vmatpush1.msra.mxu0 0.0
    %545 = vmatprep.subr.mxu0 0.0
    %546 = vmatpush1.msra.mxu0 0.0
    %547 = vmatprep.subr.mxu0 0.0
    %548 = vmatpush1.msra.mxu0 0.0
    %549 = vmatprep.subr.mxu0 0.0
    %550 = vmatpush1.msra.mxu0 0.0
    %551 = vmatprep.subr.mxu0 0.0
    %552 = vmatpush1.msra.mxu0 0.0
    %553 = vmatprep.subr.mxu0 0.0
    %554 = vmatpush1.msra.mxu0 0.0
    %555 = vmatprep.subr.mxu0 0.0
    %556 = vmatpush1.msra.mxu0 0.0
    %557 = vmatprep.subr.mxu0 0.0
    %558 = vmatpush1.msra.mxu0 0.0
    %559 = vmatprep.subr.mxu0 0.0
    %560 = vmatpush1.msra.mxu0 0.0
    %561 = vmatprep.subr.mxu0 0.0
    %562 = vmatpush1.msra.mxu0 0.0
    %563 = vmatprep.subr.mxu0 0.0
    %564 = vmatpush1.msra.mxu0 0.0
    %565 = vmatprep.subr.mxu0 0.0
    %566 = vmatpush1.msra.mxu0 0.0
    %567 = vmatprep.subr.mxu0 0.0
    %568 = vmatpush1.msra.mxu0 0.0
    %569 = vmatprep.subr.mxu0 0.0
    %570 = vmatpush1.msra.mxu0 0.0
    %571 = vmatprep.subr.mxu0 0.0
    %572 = vmatpush1.msra.mxu0 0.0
    %573 = vmatprep.subr.mxu0 0.0
    %574 = vmatpush1.msra.mxu0 0.0
    %575 = vmatprep.subr.mxu0 0.0
    %576 = vmatpush1.msra.mxu0 0.0
    %577 = vmatprep.subr.mxu0 0.0
    %578 = vmatpush1.msra.mxu0 0.0
    %579 = vmatprep.subr.mxu0 0.0
    %580 = vmatpush1.msra.mxu0 0.0
    %581 = vmatprep.mubr.f32.mxu0 0.0
    %582 = vmatmul.mubr.f32.gmra.mrb[0].mxu0 %v515
    %v583 = vpop.f32.mrb[0].mxu0
    %v584 = vadd.f32 0.0, %v583
    %v585 = vpop.f32.mrb[0].mxu0
    %v586 = vadd.f32 0.0, %v585
    %587 = vdwg.mxu0
    %v588 = vadd.f32 %v586, %v304
    %v589 = vxor.u32 %v588, 2147483648
    %v590 = vmul.f32 %v589, 1.442695
    %v591 = vpow.pop %v590
    %v592 = vadd.f32 %v591, 1.0
    %v593 = vrcp.pop %v592
    %v594 = vmul.f32 1.0, %v593
    %v595 = vtanh.pop %v588
    %v596 = vmul.f32 %v594, %v465
    %598 = vrot.lane.b32.xlu0 %v595, 64
    %v599 = vpop.permute.xlu0 %598
    %v601 = vmul.f32 %v594, %v599
    %603 = vrot.lane.b32.xlu0 %v601, 32
    %v604 = vpop.permute.xlu0 %603
    %v606 = vadd.f32 %v596, %v604
    %v607 = vtanh.pop %v606
    %609 = vrot.lane.b32.xlu0 %v607, 64
    %v610 = vpop.permute.xlu0 %609
    %v612 = vmul.f32 %v594, %v610
    %v614 = vrot.slane %v584, 2
    %v616 = vadd.f32 %v186, %v614
    %v617 = vxor.u32 %v616, 2147483648
    %v618 = vmul.f32 %v617, 1.442695
    %v619 = vpow.pop %v618
    %v620 = vadd.f32 %v619, 1.0
    %v621 = vrcp.pop %v620
    %v622 = vmul.f32 1.0, %v621
    %v623 = vtanh.pop %v616
    %v625 = vrot.slane %v496, 6
    %v627 = vmul.f32 %v622, %v625
    %629 = vrot.lane.b32.xlu0 %v623, 64
    %v630 = vpop.permute.xlu0 %629
    %v632 = vmul.f32 %v622, %v630
    %634 = vrot.lane.b32.xlu0 %v632, 32
    %v635 = vpop.permute.xlu0 %634
    %v637 = vadd.f32 %v627, %v635
    %v638 = vtanh.pop %v637
    %640 = vrot.lane.b32.xlu0 %v638, 64
    %v641 = vpop.permute.xlu0 %640
    %v643 = vmul.f32 %v622, %v641
    %645 = vrot.lane.b32.xlu0 %v643, 32
    %v646 = vpop.permute.xlu0 %645
    %v649 = vrot.slane %v612, 2
    %650 = vrot.lane.b32.xlu0 %v649, 64
    %v651 = vpop.permute.xlu0 %650
    %v653 = vsel %vm223, %v646, %v651
    %v655 = vrot.slane %v653, 6
    %v656 = vsel %vm225, %v655, 0
    %658 = vmatprep.subr.mxu0 %v45
    %659 = vmatpush1.msra.mxu0 %v44
    %660 = vmatprep.subr.mxu0 %v47
    %661 = vmatpush1.msra.mxu0 %v46
    %662 = vmatprep.subr.mxu0 %v49
    %663 = vmatpush1.msra.mxu0 %v48
    %664 = vmatprep.subr.mxu0 %v51
    %665 = vmatpush1.msra.mxu0 %v50
    %666 = vmatprep.subr.mxu0 %v53
    %667 = vmatpush1.msra.mxu0 %v52
    %668 = vmatprep.subr.mxu0 %v55
    %669 = vmatpush1.msra.mxu0 %v54
    %670 = vmatprep.subr.mxu0 %v57
    %671 = vmatpush1.msra.mxu0 %v56
    %672 = vmatprep.subr.mxu0 %v59
    %673 = vmatpush1.msra.mxu0 %v58
    %674 = vmatprep.subr.mxu0 0.0
    %675 = vmatpush1.msra.mxu0 0.0
    %676 = vmatprep.subr.mxu0 0.0
    %677 = vmatpush1.msra.mxu0 0.0
    %678 = vmatprep.subr.mxu0 0.0
    %679 = vmatpush1.msra.mxu0 0.0
    %680 = vmatprep.subr.mxu0 0.0
    %681 = vmatpush1.msra.mxu0 0.0
    %682 = vmatprep.subr.mxu0 0.0
    %683 = vmatpush1.msra.mxu0 0.0
    %684 = vmatprep.subr.mxu0 0.0
    %685 = vmatpush1.msra.mxu0 0.0
    %686 = vmatprep.subr.mxu0 0.0
    %687 = vmatpush1.msra.mxu0 0.0
    %688 = vmatprep.subr.mxu0 0.0
    %689 = vmatpush1.msra.mxu0 0.0
    %690 = vmatprep.subr.mxu0 0.0
    %691 = vmatpush1.msra.mxu0 0.0
    %692 = vmatprep.subr.mxu0 0.0
    %693 = vmatpush1.msra.mxu0 0.0
    %694 = vmatprep.subr.mxu0 0.0
    %695 = vmatpush1.msra.mxu0 0.0
    %696 = vmatprep.subr.mxu0 0.0
    %697 = vmatpush1.msra.mxu0 0.0
    %698 = vmatprep.subr.mxu0 0.0
    %699 = vmatpush1.msra.mxu0 0.0
    %700 = vmatprep.subr.mxu0 0.0
    %701 = vmatpush1.msra.mxu0 0.0
    %702 = vmatprep.subr.mxu0 0.0
    %703 = vmatpush1.msra.mxu0 0.0
    %704 = vmatprep.subr.mxu0 0.0
    %705 = vmatpush1.msra.mxu0 0.0
    %706 = vmatprep.subr.mxu0 0.0
    %707 = vmatpush1.msra.mxu0 0.0
    %708 = vmatprep.subr.mxu0 0.0
    %709 = vmatpush1.msra.mxu0 0.0
    %710 = vmatprep.subr.mxu0 0.0
    %711 = vmatpush1.msra.mxu0 0.0
    %712 = vmatprep.subr.mxu0 0.0
    %713 = vmatpush1.msra.mxu0 0.0
    %714 = vmatprep.subr.mxu0 0.0
    %715 = vmatpush1.msra.mxu0 0.0
    %716 = vmatprep.subr.mxu0 0.0
    %717 = vmatpush1.msra.mxu0 0.0
    %718 = vmatprep.subr.mxu0 0.0
    %719 = vmatpush1.msra.mxu0 0.0
    %720 = vmatprep.subr.mxu0 0.0
    %721 = vmatpush1.msra.mxu0 0.0
    %722 = vmatprep.mubr.f32.mxu0 0.0
    %723 = vmatmul.mubr.f32.gmra.mrb[0].mxu0 %v656
    %v724 = vpop.f32.mrb[0].mxu0
    %v725 = vadd.f32 0.0, %v724
    %v726 = vpop.f32.mrb[0].mxu0
    %v727 = vadd.f32 0.0, %v726
    %728 = vdwg.mxu0
    %v729 = vadd.f32 %v727, %v304
    %v730 = vxor.u32 %v729, 2147483648
    %v731 = vmul.f32 %v730, 1.442695
    %v732 = vpow.pop %v731
    %v733 = vadd.f32 %v732, 1.0
    %v734 = vrcp.pop %v733
    %v735 = vmul.f32 1.0, %v734
    %v736 = vtanh.pop %v729
    %v737 = vmul.f32 %v735, %v606
    %739 = vrot.lane.b32.xlu0 %v736, 64
    %v740 = vpop.permute.xlu0 %739
    %v742 = vmul.f32 %v735, %v740
    %744 = vrot.lane.b32.xlu0 %v742, 32
    %v745 = vpop.permute.xlu0 %744
    %v747 = vadd.f32 %v737, %v745
    %v748 = vtanh.pop %v747
    %750 = vrot.lane.b32.xlu0 %v748, 64
    %v751 = vpop.permute.xlu0 %750
    %v753 = vmul.f32 %v735, %v751
    %v754 = vadd.f32 %v191, %v725
    %v755 = vxor.u32 %v754, 2147483648
    %v756 = vmul.f32 %v755, 1.442695
    %v757 = vpow.pop %v756
    %v758 = vadd.f32 %v757, 1.0
    %v759 = vrcp.pop %v758
    %v760 = vmul.f32 1.0, %v759
    %v761 = vtanh.pop %v754
    %v763 = vrot.slane %v637, 6
    %v765 = vmul.f32 %v760, %v763
    %767 = vrot.lane.b32.xlu0 %v761, 64
    %v768 = vpop.permute.xlu0 %767
    %v770 = vmul.f32 %v760, %v768
    %772 = vrot.lane.b32.xlu0 %v770, 32
    %v773 = vpop.permute.xlu0 %772
    %v775 = vadd.f32 %v765, %v773
    %v776 = vtanh.pop %v775
    %778 = vrot.lane.b32.xlu0 %v776, 64
    %v779 = vpop.permute.xlu0 %778
    %v781 = vmul.f32 %v760, %v779
    %783 = vrot.lane.b32.xlu0 %v781, 32
    %v784 = vpop.permute.xlu0 %783
    %787 = vrot.lane.b32.xlu0 %v753, 64
    %v788 = vpop.permute.xlu0 %787
    %v790 = vsel %vm223, %v784, %v788
    %v792 = vsel %vm225, %v790, 0
    %794 = vmatprep.subr.mxu0 %v45
    %795 = vmatpush1.msra.mxu0 %v44
    %796 = vmatprep.subr.mxu0 %v47
    %797 = vmatpush1.msra.mxu0 %v46
    %798 = vmatprep.subr.mxu0 %v49
    %799 = vmatpush1.msra.mxu0 %v48
    %800 = vmatprep.subr.mxu0 %v51
    %801 = vmatpush1.msra.mxu0 %v50
    %802 = vmatprep.subr.mxu0 %v53
    %803 = vmatpush1.msra.mxu0 %v52
    %804 = vmatprep.subr.mxu0 %v55
    %805 = vmatpush1.msra.mxu0 %v54
    %806 = vmatprep.subr.mxu0 %v57
    %807 = vmatpush1.msra.mxu0 %v56
    %808 = vmatprep.subr.mxu0 %v59
    %809 = vmatpush1.msra.mxu0 %v58
    %810 = vmatprep.subr.mxu0 0.0
    %811 = vmatpush1.msra.mxu0 0.0
    %812 = vmatprep.subr.mxu0 0.0
    %813 = vmatpush1.msra.mxu0 0.0
    %814 = vmatprep.subr.mxu0 0.0
    %815 = vmatpush1.msra.mxu0 0.0
    %816 = vmatprep.subr.mxu0 0.0
    %817 = vmatpush1.msra.mxu0 0.0
    %818 = vmatprep.subr.mxu0 0.0
    %819 = vmatpush1.msra.mxu0 0.0
    %820 = vmatprep.subr.mxu0 0.0
    %821 = vmatpush1.msra.mxu0 0.0
    %822 = vmatprep.subr.mxu0 0.0
    %823 = vmatpush1.msra.mxu0 0.0
    %824 = vmatprep.subr.mxu0 0.0
    %825 = vmatpush1.msra.mxu0 0.0
    %826 = vmatprep.subr.mxu0 0.0
    %827 = vmatpush1.msra.mxu0 0.0
    %828 = vmatprep.subr.mxu0 0.0
    %829 = vmatpush1.msra.mxu0 0.0
    %830 = vmatprep.subr.mxu0 0.0
    %831 = vmatpush1.msra.mxu0 0.0
    %832 = vmatprep.subr.mxu0 0.0
    %833 = vmatpush1.msra.mxu0 0.0
    %834 = vmatprep.subr.mxu0 0.0
    %835 = vmatpush1.msra.mxu0 0.0
    %836 = vmatprep.subr.mxu0 0.0
    %837 = vmatpush1.msra.mxu0 0.0
    %838 = vmatprep.subr.mxu0 0.0
    %839 = vmatpush1.msra.mxu0 0.0
    %840 = vmatprep.subr.mxu0 0.0
    %841 = vmatpush1.msra.mxu0 0.0
    %842 = vmatprep.subr.mxu0 0.0
    %843 = vmatpush1.msra.mxu0 0.0
    %844 = vmatprep.subr.mxu0 0.0
    %845 = vmatpush1.msra.mxu0 0.0
    %846 = vmatprep.subr.mxu0 0.0
    %847 = vmatpush1.msra.mxu0 0.0
    %848 = vmatprep.subr.mxu0 0.0
    %849 = vmatpush1.msra.mxu0 0.0
    %850 = vmatprep.subr.mxu0 0.0
    %851 = vmatpush1.msra.mxu0 0.0
    %852 = vmatprep.subr.mxu0 0.0
    %853 = vmatpush1.msra.mxu0 0.0
    %854 = vmatprep.subr.mxu0 0.0
    %855 = vmatpush1.msra.mxu0 0.0
    %856 = vmatprep.subr.mxu0 0.0
    %857 = vmatpush1.msra.mxu0 0.0
    %858 = vmatprep.mubr.f32.mxu0 0.0
    %859 = vmatmul.mubr.f32.gmra.mrb[0].mxu0 %v792
    %v860 = vpop.f32.mrb[0].mxu0
    %v861 = vadd.f32 0.0, %v860
    %v862 = vpop.f32.mrb[0].mxu0
    %v863 = vadd.f32 0.0, %v862
    %864 = vdwg.mxu0
    %v865 = vadd.f32 %v863, %v304
    %v866 = vxor.u32 %v865, 2147483648
    %v867 = vmul.f32 %v866, 1.442695
    %v868 = vpow.pop %v867
    %v869 = vadd.f32 %v868, 1.0
    %v870 = vrcp.pop %v869
    %v871 = vmul.f32 1.0, %v870
    %v872 = vtanh.pop %v865
    %v873 = vmul.f32 %v871, %v747
    %875 = vrot.lane.b32.xlu0 %v872, 64
    %v876 = vpop.permute.xlu0 %875
    %v878 = vmul.f32 %v871, %v876
    %880 = vrot.lane.b32.xlu0 %v878, 32
    %v881 = vpop.permute.xlu0 %880
    %v883 = vadd.f32 %v873, %v881
    %v884 = vtanh.pop %v883
    %886 = vrot.lane.b32.xlu0 %v884, 64
    %v887 = vpop.permute.xlu0 %886
    %v889 = vmul.f32 %v871, %v887
    %v891 = vrot.slane %v861, 6
    %v893 = vadd.f32 %v191, %v891
    %v894 = vxor.u32 %v893, 2147483648
    %v895 = vmul.f32 %v894, 1.442695
    %v896 = vpow.pop %v895
    %v897 = vadd.f32 %v896, 1.0
    %v898 = vrcp.pop %v897
    %v899 = vmul.f32 1.0, %v898
    %v900 = vtanh.pop %v893
    %v902 = vrot.slane %v775, 6
    %v904 = vmul.f32 %v899, %v902
    %906 = vrot.lane.b32.xlu0 %v900, 64
    %v907 = vpop.permute.xlu0 %906
    %v909 = vmul.f32 %v899, %v907
    %911 = vrot.lane.b32.xlu0 %v909, 32
    %v912 = vpop.permute.xlu0 %911
    %v914 = vadd.f32 %v904, %v912
    %v915 = vtanh.pop %v914
    %917 = vrot.lane.b32.xlu0 %v915, 64
    %v918 = vpop.permute.xlu0 %917
    %v920 = vmul.f32 %v899, %v918
    %922 = vrot.lane.b32.xlu0 %v920, 32
    %v923 = vpop.permute.xlu0 %922
    %v926 = vrot.slane %v889, 6
    %927 = vrot.lane.b32.xlu0 %v926, 64
    %v928 = vpop.permute.xlu0 %927
    %v930 = vsel %vm223, %v923, %v928
    %v932 = vrot.slane %v930, 2
    %v933 = vsel %vm225, %v932, 0
    %935 = vmatprep.subr.mxu0 %v45
    %936 = vmatpush1.msra.mxu0 %v44
    %937 = vmatprep.subr.mxu0 %v47
    %938 = vmatpush1.msra.mxu0 %v46
    %939 = vmatprep.subr.mxu0 %v49
    %940 = vmatpush1.msra.mxu0 %v48
    %941 = vmatprep.subr.mxu0 %v51
    %942 = vmatpush1.msra.mxu0 %v50
    %943 = vmatprep.subr.mxu0 %v53
    %944 = vmatpush1.msra.mxu0 %v52
    %945 = vmatprep.subr.mxu0 %v55
    %946 = vmatpush1.msra.mxu0 %v54
    %947 = vmatprep.subr.mxu0 %v57
    %948 = vmatpush1.msra.mxu0 %v56
    %949 = vmatprep.subr.mxu0 %v59
    %950 = vmatpush1.msra.mxu0 %v58
    %951 = vmatprep.subr.mxu0 0.0
    %952 = vmatpush1.msra.mxu0 0.0
    %953 = vmatprep.subr.mxu0 0.0
    %954 = vmatpush1.msra.mxu0 0.0
    %955 = vmatprep.subr.mxu0 0.0
    %956 = vmatpush1.msra.mxu0 0.0
    %957 = vmatprep.subr.mxu0 0.0
    %958 = vmatpush1.msra.mxu0 0.0
    %959 = vmatprep.subr.mxu0 0.0
    %960 = vmatpush1.msra.mxu0 0.0
    %961 = vmatprep.subr.mxu0 0.0
    %962 = vmatpush1.msra.mxu0 0.0
    %963 = vmatprep.subr.mxu0 0.0
    %964 = vmatpush1.msra.mxu0 0.0
    %965 = vmatprep.subr.mxu0 0.0
    %966 = vmatpush1.msra.mxu0 0.0
    %967 = vmatprep.subr.mxu0 0.0
    %968 = vmatpush1.msra.mxu0 0.0
    %969 = vmatprep.subr.mxu0 0.0
    %970 = vmatpush1.msra.mxu0 0.0
    %971 = vmatprep.subr.mxu0 0.0
    %972 = vmatpush1.msra.mxu0 0.0
    %973 = vmatprep.subr.mxu0 0.0
    %974 = vmatpush1.msra.mxu0 0.0
    %975 = vmatprep.subr.mxu0 0.0
    %976 = vmatpush1.msra.mxu0 0.0
    %977 = vmatprep.subr.mxu0 0.0
    %978 = vmatpush1.msra.mxu0 0.0
    %979 = vmatprep.subr.mxu0 0.0
    %980 = vmatpush1.msra.mxu0 0.0
    %981 = vmatprep.subr.mxu0 0.0
    %982 = vmatpush1.msra.mxu0 0.0
    %983 = vmatprep.subr.mxu0 0.0
    %984 = vmatpush1.msra.mxu0 0.0
    %985 = vmatprep.subr.mxu0 0.0
    %986 = vmatpush1.msra.mxu0 0.0
    %987 = vmatprep.subr.mxu0 0.0
    %988 = vmatpush1.msra.mxu0 0.0
    %989 = vmatprep.subr.mxu0 0.0
    %990 = vmatpush1.msra.mxu0 0.0
    %991 = vmatprep.subr.mxu0 0.0
    %992 = vmatpush1.msra.mxu0 0.0
    %993 = vmatprep.subr.mxu0 0.0
    %994 = vmatpush1.msra.mxu0 0.0
    %995 = vmatprep.subr.mxu0 0.0
    %996 = vmatpush1.msra.mxu0 0.0
    %997 = vmatprep.subr.mxu0 0.0
    %998 = vmatpush1.msra.mxu0 0.0
    %999 = vmatprep.mubr.f32.mxu0 0.0
    %1000 = vmatmul.mubr.f32.gmra.mrb[0].mxu0 %v933
    %v1001 = vpop.f32.mrb[0].mxu0
    %v1002 = vadd.f32 0.0, %v1001
    %v1003 = vpop.f32.mrb[0].mxu0
    %v1004 = vadd.f32 0.0, %v1003
    %1005 = vdwg.mxu0
    %v1006 = vadd.f32 %v1004, %v304
    %v1007 = vxor.u32 %v1006, 2147483648
    %v1008 = vmul.f32 %v1007, 1.442695
    %v1009 = vpow.pop %v1008
    %v1010 = vadd.f32 %v1009, 1.0
    %v1011 = vrcp.pop %v1010
    %v1012 = vmul.f32 1.0, %v1011
    %v1013 = vtanh.pop %v1006
    %v1014 = vmul.f32 %v1012, %v883
    %1016 = vrot.lane.b32.xlu0 %v1013, 64
    %v1017 = vpop.permute.xlu0 %1016
    %v1019 = vmul.f32 %v1012, %v1017
    %1021 = vrot.lane.b32.xlu0 %v1019, 32
    %v1022 = vpop.permute.xlu0 %1021
    %v1024 = vadd.f32 %v1014, %v1022
    %v1025 = vtanh.pop %v1024
    %1027 = vrot.lane.b32.xlu0 %v1025, 64
    %v1028 = vpop.permute.xlu0 %1027
    %v1030 = vmul.f32 %v1012, %v1028
    %v1032 = vrot.slane %v1002, 4
    %v1034 = vadd.f32 %v191, %v1032
    %v1035 = vxor.u32 %v1034, 2147483648
    %v1036 = vmul.f32 %v1035, 1.442695
    %v1037 = vpow.pop %v1036
    %v1038 = vadd.f32 %v1037, 1.0
    %v1039 = vrcp.pop %v1038
    %v1040 = vmul.f32 1.0, %v1039
    %v1041 = vtanh.pop %v1034
    %v1043 = vrot.slane %v914, 6
    %v1045 = vmul.f32 %v1040, %v1043
    %1047 = vrot.lane.b32.xlu0 %v1041, 64
    %v1048 = vpop.permute.xlu0 %1047
    %v1050 = vmul.f32 %v1040, %v1048
    %1052 = vrot.lane.b32.xlu0 %v1050, 32
    %v1053 = vpop.permute.xlu0 %1052
    %v1055 = vadd.f32 %v1045, %v1053
    %v1056 = vtanh.pop %v1055
    %1058 = vrot.lane.b32.xlu0 %v1056, 64
    %v1059 = vpop.permute.xlu0 %1058
    %v1061 = vmul.f32 %v1040, %v1059
    %1063 = vrot.lane.b32.xlu0 %v1061, 32
    %v1064 = vpop.permute.xlu0 %1063
    %v1067 = vrot.slane %v1030, 4
    %1068 = vrot.lane.b32.xlu0 %v1067, 64
    %v1069 = vpop.permute.xlu0 %1068
    %v1071 = vsel %vm223, %v1064, %v1069
    %v1073 = vrot.slane %v1071, 4
    %v1074 = vsel %vm225, %v1073, 0
    %1076 = vmatprep.subr.mxu0 %v45
    %1077 = vmatpush1.msra.mxu0 %v44
    %1078 = vmatprep.subr.mxu0 %v47
    %1079 = vmatpush1.msra.mxu0 %v46
    %1080 = vmatprep.subr.mxu0 %v49
    %1081 = vmatpush1.msra.mxu0 %v48
    %1082 = vmatprep.subr.mxu0 %v51
    %1083 = vmatpush1.msra.mxu0 %v50
    %1084 = vmatprep.subr.mxu0 %v53
    %1085 = vmatpush1.msra.mxu0 %v52
    %1086 = vmatprep.subr.mxu0 %v55
    %1087 = vmatpush1.msra.mxu0 %v54
    %1088 = vmatprep.subr.mxu0 %v57
    %1089 = vmatpush1.msra.mxu0 %v56
    %1090 = vmatprep.subr.mxu0 %v59
    %1091 = vmatpush1.msra.mxu0 %v58
    %1092 = vmatprep.subr.mxu0 0.0
    %1093 = vmatpush1.msra.mxu0 0.0
    %1094 = vmatprep.subr.mxu0 0.0
    %1095 = vmatpush1.msra.mxu0 0.0
    %1096 = vmatprep.subr.mxu0 0.0
    %1097 = vmatpush1.msra.mxu0 0.0
    %1098 = vmatprep.subr.mxu0 0.0
    %1099 = vmatpush1.msra.mxu0 0.0
    %1100 = vmatprep.subr.mxu0 0.0
    %1101 = vmatpush1.msra.mxu0 0.0
    %1102 = vmatprep.subr.mxu0 0.0
    %1103 = vmatpush1.msra.mxu0 0.0
    %1104 = vmatprep.subr.mxu0 0.0
    %1105 = vmatpush1.msra.mxu0 0.0
    %1106 = vmatprep.subr.mxu0 0.0
    %1107 = vmatpush1.msra.mxu0 0.0
    %1108 = vmatprep.subr.mxu0 0.0
    %1109 = vmatpush1.msra.mxu0 0.0
    %1110 = vmatprep.subr.mxu0 0.0
    %1111 = vmatpush1.msra.mxu0 0.0
    %1112 = vmatprep.subr.mxu0 0.0
    %1113 = vmatpush1.msra.mxu0 0.0
    %1114 = vmatprep.subr.mxu0 0.0
    %1115 = vmatpush1.msra.mxu0 0.0
    %1116 = vmatprep.subr.mxu0 0.0
    %1117 = vmatpush1.msra.mxu0 0.0
    %1118 = vmatprep.subr.mxu0 0.0
    %1119 = vmatpush1.msra.mxu0 0.0
    %1120 = vmatprep.subr.mxu0 0.0
    %1121 = vmatpush1.msra.mxu0 0.0
    %1122 = vmatprep.subr.mxu0 0.0
    %1123 = vmatpush1.msra.mxu0 0.0
    %1124 = vmatprep.subr.mxu0 0.0
    %1125 = vmatpush1.msra.mxu0 0.0
    %1126 = vmatprep.subr.mxu0 0.0
    %1127 = vmatpush1.msra.mxu0 0.0
    %1128 = vmatprep.subr.mxu0 0.0
    %1129 = vmatpush1.msra.mxu0 0.0
    %1130 = vmatprep.subr.mxu0 0.0
    %1131 = vmatpush1.msra.mxu0 0.0
    %1132 = vmatprep.subr.mxu0 0.0
    %1133 = vmatpush1.msra.mxu0 0.0
    %1134 = vmatprep.subr.mxu0 0.0
    %1135 = vmatpush1.msra.mxu0 0.0
    %1136 = vmatprep.subr.mxu0 0.0
    %1137 = vmatpush1.msra.mxu0 0.0
    %1138 = vmatprep.subr.mxu0 0.0
    %1139 = vmatpush1.msra.mxu0 0.0
    %1140 = vmatprep.mubr.f32.mxu0 0.0
    %1141 = vmatmul.mubr.f32.gmra.mrb[0].mxu0 %v1074
    %v1142 = vpop.f32.mrb[0].mxu0
    %v1143 = vadd.f32 0.0, %v1142
    %v1144 = vpop.f32.mrb[0].mxu0
    %v1145 = vadd.f32 0.0, %v1144
    %1146 = vdwg.mxu0
    %v1147 = vadd.f32 %v1145, %v304
    %v1148 = vxor.u32 %v1147, 2147483648
    %v1149 = vmul.f32 %v1148, 1.442695
    %v1150 = vpow.pop %v1149
    %v1151 = vadd.f32 %v1150, 1.0
    %v1152 = vrcp.pop %v1151
    %v1153 = vmul.f32 1.0, %v1152
    %v1154 = vtanh.pop %v1147
    %v1155 = vmul.f32 %v1153, %v1024
    %1157 = vrot.lane.b32.xlu0 %v1154, 64
    %v1158 = vpop.permute.xlu0 %1157
    %v1160 = vmul.f32 %v1153, %v1158
    %1162 = vrot.lane.b32.xlu0 %v1160, 32
    %v1163 = vpop.permute.xlu0 %1162
    %v1165 = vadd.f32 %v1155, %v1163
    %v1166 = vtanh.pop %v1165
    %1168 = vrot.lane.b32.xlu0 %v1166, 64
    %v1169 = vpop.permute.xlu0 %1168
    %v1171 = vmul.f32 %v1153, %v1169
    %v1173 = vrot.slane %v1143, 2
    %v1175 = vadd.f32 %v191, %v1173
    %v1176 = vxor.u32 %v1175, 2147483648
    %v1177 = vmul.f32 %v1176, 1.442695
    %v1178 = vpow.pop %v1177
    %v1179 = vadd.f32 %v1178, 1.0
    %v1180 = vrcp.pop %v1179
    %v1181 = vmul.f32 1.0, %v1180
    %v1182 = vtanh.pop %v1175
    %v1184 = vrot.slane %v1055, 6
    %v1186 = vmul.f32 %v1181, %v1184
    %1188 = vrot.lane.b32.xlu0 %v1182, 64
    %v1189 = vpop.permute.xlu0 %1188
    %v1191 = vmul.f32 %v1181, %v1189
    %1193 = vrot.lane.b32.xlu0 %v1191, 32
    %v1194 = vpop.permute.xlu0 %1193
    %v1196 = vadd.f32 %v1186, %v1194
    %v1197 = vtanh.pop %v1196
    %1199 = vrot.lane.b32.xlu0 %v1197, 64
    %v1200 = vpop.permute.xlu0 %1199
    %v1202 = vmul.f32 %v1181, %v1200
    %1204 = vrot.lane.b32.xlu0 %v1202, 32
    %v1205 = vpop.permute.xlu0 %1204
    %v1208 = vrot.slane %v1171, 2
    %1209 = vrot.lane.b32.xlu0 %v1208, 64
    %v1210 = vpop.permute.xlu0 %1209
    %v1212 = vsel %vm223, %v1205, %v1210
    %v1214 = vrot.slane %v1212, 6
    %v1215 = vsel %vm225, %v1214, 0
    %1217 = vmatprep.subr.mxu0 %v45
    %1218 = vmatpush1.msra.mxu0 %v44
    %1219 = vmatprep.subr.mxu0 %v47
    %1220 = vmatpush1.msra.mxu0 %v46
    %1221 = vmatprep.subr.mxu0 %v49
    %1222 = vmatpush1.msra.mxu0 %v48
    %1223 = vmatprep.subr.mxu0 %v51
    %1224 = vmatpush1.msra.mxu0 %v50
    %1225 = vmatprep.subr.mxu0 %v53
    %1226 = vmatpush1.msra.mxu0 %v52
    %1227 = vmatprep.subr.mxu0 %v55
    %1228 = vmatpush1.msra.mxu0 %v54
    %1229 = vmatprep.subr.mxu0 %v57
    %1230 = vmatpush1.msra.mxu0 %v56
    %1231 = vmatprep.subr.mxu0 %v59
    %1232 = vmatpush1.msra.mxu0 %v58
    %1233 = vmatprep.subr.mxu0 0.0
    %1234 = vmatpush1.msra.mxu0 0.0
    %1235 = vmatprep.subr.mxu0 0.0
    %1236 = vmatpush1.msra.mxu0 0.0
    %1237 = vmatprep.subr.mxu0 0.0
    %1238 = vmatpush1.msra.mxu0 0.0
    %1239 = vmatprep.subr.mxu0 0.0
    %1240 = vmatpush1.msra.mxu0 0.0
    %1241 = vmatprep.subr.mxu0 0.0
    %1242 = vmatpush1.msra.mxu0 0.0
    %1243 = vmatprep.subr.mxu0 0.0
    %1244 = vmatpush1.msra.mxu0 0.0
    %1245 = vmatprep.subr.mxu0 0.0
    %1246 = vmatpush1.msra.mxu0 0.0
    %1247 = vmatprep.subr.mxu0 0.0
    %1248 = vmatpush1.msra.mxu0 0.0
    %1249 = vmatprep.subr.mxu0 0.0
    %1250 = vmatpush1.msra.mxu0 0.0
    %1251 = vmatprep.subr.mxu0 0.0
    %1252 = vmatpush1.msra.mxu0 0.0
    %1253 = vmatprep.subr.mxu0 0.0
    %1254 = vmatpush1.msra.mxu0 0.0
    %1255 = vmatprep.subr.mxu0 0.0
    %1256 = vmatpush1.msra.mxu0 0.0
    %1257 = vmatprep.subr.mxu0 0.0
    %1258 = vmatpush1.msra.mxu0 0.0
    %1259 = vmatprep.subr.mxu0 0.0
    %1260 = vmatpush1.msra.mxu0 0.0
    %1261 = vmatprep.subr.mxu0 0.0
    %1262 = vmatpush1.msra.mxu0 0.0
    %1263 = vmatprep.subr.mxu0 0.0
    %1264 = vmatpush1.msra.mxu0 0.0
    %1265 = vmatprep.subr.mxu0 0.0
    %1266 = vmatpush1.msra.mxu0 0.0
    %1267 = vmatprep.subr.mxu0 0.0
    %1268 = vmatpush1.msra.mxu0 0.0
    %1269 = vmatprep.subr.mxu0 0.0
    %1270 = vmatpush1.msra.mxu0 0.0
    %1271 = vmatprep.subr.mxu0 0.0
    %1272 = vmatpush1.msra.mxu0 0.0
    %1273 = vmatprep.subr.mxu0 0.0
    %1274 = vmatpush1.msra.mxu0 0.0
    %1275 = vmatprep.subr.mxu0 0.0
    %1276 = vmatpush1.msra.mxu0 0.0
    %1277 = vmatprep.subr.mxu0 0.0
    %1278 = vmatpush1.msra.mxu0 0.0
    %1279 = vmatprep.subr.mxu0 0.0
    %1280 = vmatpush1.msra.mxu0 0.0
    %1281 = vmatprep.mubr.f32.mxu0 0.0
    %1282 = vmatmul.mubr.f32.gmra.mrb[0].mxu0 %v1215
    %v1283 = vpop.f32.mrb[0].mxu0
    %v1284 = vpop.f32.mrb[0].mxu0
    %v1285 = vadd.f32 0.0, %v1284
    %1286 = vdwg.mxu0
    %v1287 = vadd.f32 %v1285, %v304
    %v1288 = vxor.u32 %v1287, 2147483648
    %v1289 = vmul.f32 %v1288, 1.442695
    %v1290 = vpow.pop %v1289
    %v1291 = vadd.f32 %v1290, 1.0
    %v1292 = vrcp.pop %v1291
    %v1293 = vmul.f32 1.0, %v1292
    %v1294 = vtanh.pop %v1287
    %v1295 = vmul.f32 %v1293, %v1165
    %1297 = vrot.lane.b32.xlu0 %v1294, 64
    %v1298 = vpop.permute.xlu0 %1297
    %v1300 = vmul.f32 %v1293, %v1298
    %1302 = vrot.lane.b32.xlu0 %v1300, 32
    %v1303 = vpop.permute.xlu0 %1302
    %v1305 = vadd.f32 %v1295, %v1303
    %v1306 = vtanh.pop %v1305
    %1308 = vrot.lane.b32.xlu0 %v1306, 64
    %v1309 = vpop.permute.xlu0 %1308
    %v1311 = vmul.f32 %v1293, %v1309
    %1312 = vrot.lane.b32.xlu0 %v330, 32
    %v1313 = vpop.permute.xlu0 %1312
    %1315 = vrot.lane.b32.xlu0 %v471, 64
    %v1316 = vpop.permute.xlu0 %1315
    %1318 = vrot.lane.b32.xlu0 %v612, 96
    %v1319 = vpop.permute.xlu0 %1318
    %1321 = vrot.lane.b32.xlu0 %v889, 32
    %v1322 = vpop.permute.xlu0 %1321
    %1324 = vrot.lane.b32.xlu0 %v1030, 64
    %v1325 = vpop.permute.xlu0 %1324
    %1327 = vrot.lane.b32.xlu0 %v1171, 96
    %v1328 = vpop.permute.xlu0 %1327
    %v1330 = vrot.slane %v1202, 6
    %1331 = vrot.lane.b32.xlu0 %v1330, 32
    %v1332 = vpop.permute.xlu0 %1331
    %1335 = vrot.lane.b32.xlu0 %v1311, 64
    %v1336 = vpop.permute.xlu0 %1335
    %v1339 = vrot.slane %v1196, 6
    %1340 = vrot.lane.b32.xlu0 %v1339, 32
    %v1341 = vpop.permute.xlu0 %1340
    %1344 = vrot.lane.b32.xlu0 %v1305, 64
    %v1345 = vpop.permute.xlu0 %1344
    %v1347 = vsel %vm223, %v1313, %v1316
    %v1348 = vsel %vm225, %v1347, %v1319
    %vm1349 = vcmask 785408
    %v1350 = vsel %vm1349, %v1348, %v753
    %v1351 = vsel %vm223, %v1322, %v1325
    %v1352 = vsel %vm225, %v1351, %v1328
    %v1353 = vsel %vm1349, %v1352, %v1311
    %v1354 = vsel %vm223, %v1332, %v1336
    %v1355 = vsel %vm225, %v1354, %v1341
    %v1356 = vsel %vm1349, %v1355, %v1345
    %v1360 = vcombine.low %v1350, %v1353
    %v1362 = vunpack.c.l.s4 1983009808
    %v1363 = vunpack.c.0.s8 %v1362
    %v1364 = vlaneseq
    %v1365 = vshrl.u32 %v1364, 7
    %v1366 = vsub.s32 %v1363, %v1365
    %v1367 = vrot.slane %v1360, %v1366
    %v1369 = vunpack.c.l.s4 1983009808
    %v1370 = vunpack.c.0.s8 %v1369
    %v1371 = vlaneseq
    %v1372 = vshrl.u32 %v1371, 7
    %v1373 = vsub.s32 %v1370, %v1372
    %v1374 = vrot.slane %v1356, %v1373
    %v1375 = vcombine.low %v1367, %v1374
    %1377 = vst [vmem:[#allocation5] sm:$0x3f] %v1375
    // Predicated region
    $region26: #{tpu_custom_call.1} parent=1 // pred_check
      _
    $region27: #{tpu_custom_call.1} parent=1 // pred_check_branch
      %1379 = sbr.rel (0) target = $region29
    $region28: #{tpu_custom_call.1} parent=1 // pred_region
      %s1381 = ssub.s32 96, 96
      %1382 = vsyncadd [#allocation4], %s1381
      %s1384 = sshll.u32 [#allocation5], 4
      %s1385 = int_to_ptr.vmem [resolvable:$true] %s1384
      %1387 = dma.vmem_to_hbm [thread:$0]  %s1385, 96, %s5, [#allocation4]
    $region29: #{tpu_custom_call.1} parent=1 // pred_fallthru
      _
    // Predicated region
    $region30: #{tpu_custom_call.1} parent=1 // pred_check
      _
    $region31: #{tpu_custom_call.1} parent=1 // pred_check_branch
      %1389 = sbr.rel (0) target = $region33
    $region32: #{tpu_custom_call.1} parent=1 // pred_region
      %1390 = dma.done [#allocation4], 96
    $region33: #{tpu_custom_call.1} parent=1 // pred_fallthru
      _
    %1391 = vsyncpa [#allocation3], 1
    %1392 = vsyncpa [#allocation4], 1

</llo_original>
